<compile_context>
chip_gen: v5e
topology: v5e:2x2
jax: 0.10.0
libtpu: 0.0.40
codegen_flags: <defaults>
</compile_context>

<pallas_src>
import functools

import jax
import jax.numpy as jnp
from jax import lax
from jax.experimental import pallas as pl
from jax.experimental.pallas import tpu as pltpu

EPS_MSG = 1e-7     # GENConv eps added to relu'd messages
EPS_BN = 1e-5      # BatchNorm1d eps
EPS_NORM = 1e-12   # F.normalize / MessageNorm clamp + softmax-denominator guard

_VMEM = pltpu.MemorySpace.VMEM
_SMEM = pltpu.MemorySpace.SMEM

# TN dot_general: contract dim 0 of both operands (i.e. lhs.T @ rhs).
_TN = (((0,), (0,)), ((), ()))


# ---------------------------------------------------------------------------
# Kernel 1: the three GENConv layers fused into one pallas_call.
#   gsrc: [E, N] bf16 one-hot (edge -> source node)     -- gather matmul
#   mdst: [N, E] bf16 one-hot (node <- incoming edges)  -- scatter matmul
# The one-hot matrices are DMA'd once and reused by all three layers; the
# [N, H] activations stay VMEM-resident between layers.
# ---------------------------------------------------------------------------
def _conv_stack_kernel(x_ref, gsrc_ref, mdst_ref,
                       w_src_ref, w_dst_ref,
                       t1_ref, s1_ref, w1a_ref, g1a_ref, b1a_ref, w1b_ref,
                       t2_ref, s2_ref, w2a_ref, g2a_ref, b2a_ref, w2b_ref,
                       t3_ref, s3_ref, w3a_ref, g3a_ref, b3a_ref, w3b_ref,
                       out_ref):
    gsrc = gsrc_ref[...].astype(jnp.float32)          # [E, N]  (exact 0/1)
    mdst = mdst_ref[...].astype(jnp.float32)          # [N, E]

    def genconv(x, x_src, x_dst, t, scale, w1, bn_g, bn_b, w2):
        h = x_src.shape[1]
        # message: m_e = relu(x_src[src[e]]) + eps   (gather via one-hot matmul)
        xe = jnp.dot(gsrc, x_src, preferred_element_type=jnp.float32)   # [E, H]
        m = jnp.maximum(xe, 0.0) + EPS_MSG
        # Softmax aggregation with temperature t.  Shift by the global
        # per-feature max (softmax is shift invariant); fuse both scatters into
        # a single lane-dense [E, 2H] matmul and divide at node level, which
        # eliminates the per-edge denominator gather (and gdst) entirely.
        z = m * t
        z = z - jnp.max(z, axis=0, keepdims=True)
        ez = jnp.exp(z)                                                  # [E, H]
        scat = jnp.dot(mdst, jnp.concatenate([ez, ez * m], axis=-1),
                       preferred_element_type=jnp.float32)               # [N, 2H]
        denom = jnp.maximum(scat[:, :h], EPS_NORM)   # guard: isolated / underflowed
        agg = scat[:, h:] * pl.reciprocal(denom, approx=True)            # [N, H]
        # MessageNorm: normalize(agg, 2, -1) * ||x||_2 * scale  (EUP rsqrt/sqrt)
        agg_ss = jnp.sum(agg * agg, axis=-1, keepdims=True)
        x_ss = jnp.sum(x * x, axis=-1, keepdims=True)
        gain = (lax.rsqrt(jnp.maximum(agg_ss, EPS_NORM * EPS_NORM))
                * jnp.sqrt(x_ss) * scale)
        out = agg * gain + x_dst                                         # [N, H]
        # MLP: Linear(H,2H) -> BatchNorm1d(2H) (batch stats) -> ReLU -> Linear(2H,H)
        h1 = jnp.dot(out, w1, preferred_element_type=jnp.float32)
        mean = jnp.mean(h1, axis=0, keepdims=True)
        var = jnp.mean((h1 - mean) ** 2, axis=0, keepdims=True)
        h1 = (h1 - mean) * lax.rsqrt(var + EPS_BN) * bn_g + bn_b
        h1 = jnp.maximum(h1, 0.0)
        return jnp.dot(h1, w2, preferred_element_type=jnp.float32)

    # conv1: in_channels != hidden -> lin_src / lin_dst projections.
    x0 = x_ref[...]
    x_src = jnp.dot(x0, w_src_ref[...], preferred_element_type=jnp.float32)
    x_dst = jnp.dot(x0, w_dst_ref[...], preferred_element_type=jnp.float32)
    h = genconv(x0, x_src, x_dst, t1_ref[0], s1_ref[0],
                w1a_ref[...], g1a_ref[...], b1a_ref[...], w1b_ref[...])

    # conv2 / conv3: tanh pre-activation, shared in/out channels.
    h = jnp.tanh(h)
    h = genconv(h, h, h, t2_ref[0], s2_ref[0],
                w2a_ref[...], g2a_ref[...], b2a_ref[...], w2b_ref[...])
    h = jnp.tanh(h)
    h = genconv(h, h, h, t3_ref[0], s3_ref[0],
                w3a_ref[...], g3a_ref[...], b3a_ref[...], w3b_ref[...])
    out_ref[...] = h


def conv_stack(x, params, gsrc, mdst):
    n, fin = x.shape
    p1 = params["conv1"]
    p2, p3 = params["gcs"]
    h = p1["w2"].shape[1]
    e = gsrc.shape[0]

    args = [x, gsrc, mdst, p1["w_src"], p1["w_dst"]]
    for p in (p1, p2, p3):
        args += [p["t"], p["scale"], p["w1"], p["bn_g"], p["bn_b"], p["w2"]]

    v = pl.BlockSpec(memory_space=_VMEM)
    s = pl.BlockSpec(memory_space=_SMEM)
    in_specs = [v] * 5 + ([s, s] + [v] * 4) * 3

    # Advisory cost estimate (dominated by the one-hot gather/scatter matmuls).
    flops = 2 * (2 * n * fin * h)                          # conv1 projections
    flops += 3 * (2 * e * n * h + 2 * e * n * 2 * h)       # gather + fused scatter
    flops += 3 * (2 * n * h * 2 * h + 2 * n * 2 * h * h)   # per-layer MLP
    transcendentals = 3 * (e * h + 6 * n) + 2 * n * h
    bytes_accessed = sum(int(a.size) * a.dtype.itemsize for a in args) + n * h * 4

    return pl.pallas_call(
        _conv_stack_kernel,
        out_shape=jax.ShapeDtypeStruct((n, h), jnp.float32),
        in_specs=in_specs,
        out_specs=pl.BlockSpec(memory_space=_VMEM),
        compiler_params=pltpu.CompilerParams(vmem_limit_bytes=48 * 1024 * 1024),
        cost_estimate=pl.CostEstimate(flops=int(flops),
                                      transcendentals=int(transcendentals),
                                      bytes_accessed=int(bytes_accessed)),
    )(*args)


# ---------------------------------------------------------------------------
# Kernel 2: GlobalAttention pooling (gate_nn = Lin -> ReLU -> Lin(.,1)) fused
# with the MLP head (3 x [BN -> Linear -> tanh], then BN -> Linear [-> sigmoid]).
# Only bt [N, G] (one orientation of the graph one-hot) enters the kernel.
# ---------------------------------------------------------------------------
def _pool_head_kernel(ends_in_sigmoid, x_ref, bt_ref,
                      wg1_ref, bg1_ref, wg2_ref, bg2_ref,
                      g1_ref, b1_ref, w1_ref, c1_ref,
                      g2_ref, b2_ref, w2_ref, c2_ref,
                      g3_ref, b3_ref, w3_ref, c3_ref,
                      g4_ref, b4_ref, wf_ref, cf_ref,
                      out_ref):
    x = x_ref[...]                                     # [N, H]
    bt = bt_ref[...].astype(jnp.float32)               # [N, G] (exact 0/1)

    # gate_nn
    hidden = jnp.maximum(
        jnp.dot(x, wg1_ref[...], preferred_element_type=jnp.float32) + bg1_ref[...],
        0.0)
    gate = (jnp.dot(hidden, wg2_ref[...], preferred_element_type=jnp.float32)
            + bg2_ref[...])                            # [N, 1]

    # per-graph softmax over nodes (exact per-group max subtraction)
    masked = jnp.where(bt > 0.5, gate, -1e30)          # [N, G]
    gmax = jnp.max(masked, axis=0, keepdims=True)      # [1, G]
    nmax = jnp.sum(bt * gmax, axis=1, keepdims=True)   # [N, 1]
    eg = jnp.exp(gate - nmax)                          # [N, 1]
    gden = jnp.sum(bt * eg, axis=0, keepdims=True)     # [1, G]
    nden = jnp.sum(bt * gden, axis=1, keepdims=True)   # [N, 1]
    alpha = eg * pl.reciprocal(nden, approx=True)      # [N, 1]

    # weighted per-graph pooling: bt.T @ (alpha * x) via a TN dot_general so no
    # transposed duplicate of the pooling one-hot is ever materialized.
    pooled = lax.dot_general(bt, alpha * x, _TN,
                             preferred_element_type=jnp.float32)   # [G, H]

    def bn(v, g, b):   # BatchNorm1d with batch statistics
        mean = jnp.mean(v, axis=0, keepdims=True)
        var = jnp.mean((v - mean) ** 2, axis=0, keepdims=True)
        return (v - mean) * lax.rsqrt(var + EPS_BN) * g + b

    v = pooled
    for g_ref, b_ref, w_ref, c_ref in ((g1_ref, b1_ref, w1_ref, c1_ref),
                                       (g2_ref, b2_ref, w2_ref, c2_ref),
                                       (g3_ref, b3_ref, w3_ref, c3_ref)):
        v = bn(v, g_ref[...], b_ref[...])
        v = jnp.tanh(jnp.dot(v, w_ref[...],
                             preferred_element_type=jnp.float32) + c_ref[...])
    v = bn(v, g4_ref[...], b4_ref[...])
    v = jnp.dot(v, wf_ref[...], preferred_element_type=jnp.float32) + cf_ref[...]
    if ends_in_sigmoid:
        v = jax.nn.sigmoid(v)
    out_ref[...] = v


def pool_head(x, glob_p, head_p, bt, ends_in_sigmoid):
    g = bt.shape[1]
    out_dim = head_p["w_out"].shape[1]
    args = [x, bt, glob_p["wg1"], glob_p["bg1"], glob_p["wg2"], glob_p["bg2"]]
    for i in range(3):
        args += [head_p["bn_g"][i], head_p["bn_b"][i], head_p["w"][i], head_p["b"][i]]
    args += [head_p["bn_g"][3], head_p["bn_b"][3], head_p["w_out"], head_p["b_out"]]
    return pl.pallas_call(
        functools.partial(_pool_head_kernel, ends_in_sigmoid),
        out_shape=jax.ShapeDtypeStruct((g, out_dim), jnp.float32),
        in_specs=[pl.BlockSpec(memory_space=_VMEM)] * len(args),
        out_specs=pl.BlockSpec(memory_space=_VMEM),
        compiler_params=pltpu.CompilerParams(vmem_limit_bytes=48 * 1024 * 1024),
    )(*args)


# ---------------------------------------------------------------------------
# Full forward + deterministic parameter init + graph construction (glue)
# ---------------------------------------------------------------------------
def forward(params, x, src, dst, batch, num_graphs, ends_in_sigmoid=False):
    n = x.shape[0]
    idx_n = jnp.arange(n, dtype=src.dtype)
    idx_g = jnp.arange(num_graphs, dtype=batch.dtype)
    # One-hot matrices in bf16 (values exactly 0/1).  Only one orientation of
    # each is built; gdst is never materialized (the fused-scatter algebra made
    # the per-edge denominator gather unnecessary).
    gsrc = (src[:, None] == idx_n[None, :]).astype(jnp.bfloat16)    # [E, N]
    mdst = (idx_n[:, None] == dst[None, :]).astype(jnp.bfloat16)    # [N, E]
    bt = (batch[:, None] == idx_g[None, :]).astype(jnp.bfloat16)    # [N, G]

    h = conv_stack(x, params, gsrc, mdst)
    return pool_head(h, params["glob"], params["head"], bt, ends_in_sigmoid)


def init_params(key, fin, h, out_dim):
    keys = iter(jax.random.split(key, 64))

    def w(shape, scale=0.1):
        return jax.random.normal(next(keys), shape, jnp.float32) * scale

    def genconv_params(in_ch):
        p = {
            "t": jnp.ones((1,), jnp.float32),       # learnable temperature (init 1.0)
            "scale": jnp.ones((1,), jnp.float32),   # MessageNorm scale (init 1.0)
            "w1": w((h, 2 * h)),
            "bn_g": 1.0 + 0.1 * jax.random.normal(next(keys), (1, 2 * h), jnp.float32),
            "bn_b": 0.1 * jax.random.normal(next(keys), (1, 2 * h), jnp.float32),
            "w2": w((2 * h, h)),
        }
        if in_ch != h:
            p["w_src"] = w((in_ch, h))
            p["w_dst"] = w((in_ch, h))
        return p

    params = {
        "conv1": genconv_params(fin),
        "gcs": [genconv_params(h) for _ in range(2)],
        "glob": {
            "wg1": w((h, h)), "bg1": w((1, h)),
            "wg2": w((h, 1)), "bg2": w((1, 1)),
        },
        "head": {
            "bn_g": [1.0 + 0.1 * jax.random.normal(next(keys), (1, h), jnp.float32)
                     for _ in range(4)],
            "bn_b": [0.1 * jax.random.normal(next(keys), (1, h), jnp.float32)
                     for _ in range(4)],
            "w": [w((h, h)) for _ in range(3)],
            "b": [w((1, h)) for _ in range(3)],
            "w_out": w((h, out_dim)),
            "b_out": w((1, out_dim)),
        },
    }
    return params


def ring_graph(num_graphs, nodes_per_graph):
    src, dst = [], []
    for g in range(num_graphs):
        base = g * nodes_per_graph
        for i in range(nodes_per_graph):
            a = base + i
            b = base + (i + 1) % nodes_per_graph
            src += [a, b]
            dst += [b, a]
    return jnp.array(src, jnp.int32), jnp.array(dst, jnp.int32)


if __name__ == "__main__":
    FIN, H, OUT = 8, 32, 4
    NUM_GRAPHS, NODES_PER_GRAPH = 2, 8
    N = NUM_GRAPHS * NODES_PER_GRAPH

    key = jax.random.PRNGKey(0)
    k_x, k_p = jax.random.split(key)

    x = jax.random.normal(k_x, (N, FIN), jnp.float32)            # node features
    src, dst = ring_graph(NUM_GRAPHS, NODES_PER_GRAPH)           # edge_index rows
    batch = jnp.repeat(jnp.arange(NUM_GRAPHS, dtype=jnp.int32), NODES_PER_GRAPH)

    params = init_params(k_p, FIN, H, OUT)

    out = forward(params, x, src, dst, batch, NUM_GRAPHS, ends_in_sigmoid=False)
    out = jax.block_until_ready(out)
    assert out.shape == (NUM_GRAPHS, OUT)
    assert bool(jnp.all(jnp.isfinite(out)))
    print("KERNEL_OK")
</pallas_src>

<mosaic_0001>
module attributes {stable_mosaic.version = 11 : i64} {
  func.func @_conv_stack_kernel(%arg0: memref<16x8xf32, #tpu.memory_space<vmem>>, %arg1: memref<32x16xbf16, #tpu.memory_space<vmem>>, %arg2: memref<16x32xbf16, #tpu.memory_space<vmem>>, %arg3: memref<8x32xf32, #tpu.memory_space<vmem>>, %arg4: memref<8x32xf32, #tpu.memory_space<vmem>>, %arg5: memref<1xf32, #tpu.memory_space<smem>>, %arg6: memref<1xf32, #tpu.memory_space<smem>>, %arg7: memref<32x64xf32, #tpu.memory_space<vmem>>, %arg8: memref<1x64xf32, #tpu.memory_space<vmem>>, %arg9: memref<1x64xf32, #tpu.memory_space<vmem>>, %arg10: memref<64x32xf32, #tpu.memory_space<vmem>>, %arg11: memref<1xf32, #tpu.memory_space<smem>>, %arg12: memref<1xf32, #tpu.memory_space<smem>>, %arg13: memref<32x64xf32, #tpu.memory_space<vmem>>, %arg14: memref<1x64xf32, #tpu.memory_space<vmem>>, %arg15: memref<1x64xf32, #tpu.memory_space<vmem>>, %arg16: memref<64x32xf32, #tpu.memory_space<vmem>>, %arg17: memref<1xf32, #tpu.memory_space<smem>>, %arg18: memref<1xf32, #tpu.memory_space<smem>>, %arg19: memref<32x64xf32, #tpu.memory_space<vmem>>, %arg20: memref<1x64xf32, #tpu.memory_space<vmem>>, %arg21: memref<1x64xf32, #tpu.memory_space<vmem>>, %arg22: memref<64x32xf32, #tpu.memory_space<vmem>>, %arg23: memref<16x32xf32, #tpu.memory_space<vmem>>) attributes {dimension_semantics = [], scalar_prefetch = 0 : i64, scratch_operands = 0 : i64, tpu.core_type = #tpu.core_type<tc>} {
    %c0 = arith.constant 0 : index
    %c0_0 = arith.constant 0 : index
    %0 = vector.load %arg1[%c0, %c0_0] : memref<32x16xbf16, #tpu.memory_space<vmem>>, vector<32x16xbf16>
    %1 = arith.extf %0 : vector<32x16xbf16> to vector<32x16xf32>
    %c0_1 = arith.constant 0 : index
    %c0_2 = arith.constant 0 : index
    %2 = vector.load %arg2[%c0_1, %c0_2] : memref<16x32xbf16, #tpu.memory_space<vmem>>, vector<16x32xbf16>
    %3 = arith.extf %2 : vector<16x32xbf16> to vector<16x32xf32>
    %c0_3 = arith.constant 0 : index
    %c0_4 = arith.constant 0 : index
    %4 = vector.load %arg0[%c0_3, %c0_4] : memref<16x8xf32, #tpu.memory_space<vmem>>, vector<16x8xf32>
    %c0_5 = arith.constant 0 : index
    %c0_6 = arith.constant 0 : index
    %5 = vector.load %arg3[%c0_5, %c0_6] : memref<8x32xf32, #tpu.memory_space<vmem>>, vector<8x32xf32>
    %cst = arith.constant dense<0.000000e+00> : vector<16x32xf32>
    %6 = tpu.matmul %4, %5, %cst {dimension_numbers = #tpu.dot_dimension_numbers<[1], [0], [0], [1], [0, 0, 1, 1], [], []>} : vector<16x8xf32>, vector<8x32xf32>, vector<16x32xf32> -> vector<16x32xf32>
    %c0_7 = arith.constant 0 : index
    %c0_8 = arith.constant 0 : index
    %7 = vector.load %arg4[%c0_7, %c0_8] : memref<8x32xf32, #tpu.memory_space<vmem>>, vector<8x32xf32>
    %cst_9 = arith.constant dense<0.000000e+00> : vector<16x32xf32>
    %8 = tpu.matmul %4, %7, %cst_9 {dimension_numbers = #tpu.dot_dimension_numbers<[1], [0], [0], [1], [0, 0, 1, 1], [], []>} : vector<16x8xf32>, vector<8x32xf32>, vector<16x32xf32> -> vector<16x32xf32>
    %c0_10 = arith.constant 0 : index
    %9 = memref.load %arg5[%c0_10] : memref<1xf32, #tpu.memory_space<smem>>
    %c0_11 = arith.constant 0 : index
    %10 = memref.load %arg6[%c0_11] : memref<1xf32, #tpu.memory_space<smem>>
    %c0_12 = arith.constant 0 : index
    %c0_13 = arith.constant 0 : index
    %11 = vector.load %arg7[%c0_12, %c0_13] : memref<32x64xf32, #tpu.memory_space<vmem>>, vector<32x64xf32>
    %c0_14 = arith.constant 0 : index
    %c0_15 = arith.constant 0 : index
    %12 = vector.load %arg8[%c0_14, %c0_15] : memref<1x64xf32, #tpu.memory_space<vmem>>, vector<1x64xf32>
    %c0_16 = arith.constant 0 : index
    %c0_17 = arith.constant 0 : index
    %13 = vector.load %arg9[%c0_16, %c0_17] : memref<1x64xf32, #tpu.memory_space<vmem>>, vector<1x64xf32>
    %c0_18 = arith.constant 0 : index
    %c0_19 = arith.constant 0 : index
    %14 = vector.load %arg10[%c0_18, %c0_19] : memref<64x32xf32, #tpu.memory_space<vmem>>, vector<64x32xf32>
    %cst_20 = arith.constant dense<0.000000e+00> : vector<32x32xf32>
    %15 = tpu.matmul %1, %6, %cst_20 {dimension_numbers = #tpu.dot_dimension_numbers<[1], [0], [0], [1], [0, 0, 1, 1], [], []>} : vector<32x16xf32>, vector<16x32xf32>, vector<32x32xf32> -> vector<32x32xf32>
    %cst_21 = arith.constant 0.000000e+00 : f32
    %16 = vector.broadcast %cst_21 : f32 to vector<32x32xf32>
    %17 = arith.maximumf %15, %16 : vector<32x32xf32>
    %cst_22 = arith.constant 1.000000e-07 : f32
    %18 = vector.broadcast %cst_22 : f32 to vector<32x32xf32>
    %19 = arith.addf %17, %18 : vector<32x32xf32>
    %20 = vector.broadcast %9 : f32 to vector<32x32xf32>
    %21 = arith.mulf %19, %20 : vector<32x32xf32>
    %cst_23 = arith.constant dense<0xFF800000> : vector<32xf32>
    %22 = vector.multi_reduction <maximumf>, %21, %cst_23 [0] : vector<32x32xf32> to vector<32xf32>
    %23 = vector.shape_cast %22 : vector<32xf32> to vector<1x32xf32>
    %24 = vector.broadcast %23 : vector<1x32xf32> to vector<32x32xf32>
    %25 = arith.subf %21, %24 : vector<32x32xf32>
    %26 = math.exp %25 : vector<32x32xf32>
    %27 = arith.mulf %26, %19 : vector<32x32xf32>
    %28 = tpu.concatenate %26, %27 in 1 : vector<32x32xf32>, vector<32x32xf32> -> vector<32x64xf32>
    %cst_24 = arith.constant dense<0.000000e+00> : vector<16x64xf32>
    %29 = tpu.matmul %3, %28, %cst_24 {dimension_numbers = #tpu.dot_dimension_numbers<[1], [0], [0], [1], [0, 0, 1, 1], [], []>} : vector<16x32xf32>, vector<32x64xf32>, vector<16x64xf32> -> vector<16x64xf32>
    %30 = vector.extract_strided_slice %29 {offsets = [0, 0], sizes = [16, 32], strides = [1, 1]} : vector<16x64xf32> to vector<16x32xf32>
    %cst_25 = arith.constant 9.99999996E-13 : f32
    %31 = vector.broadcast %cst_25 : f32 to vector<16x32xf32>
    %32 = arith.maximumf %30, %31 : vector<16x32xf32>
    %33 = vector.extract_strided_slice %29 {offsets = [0, 32], sizes = [16, 32], strides = [1, 1]} : vector<16x64xf32> to vector<16x32xf32>
    %34 = tpu.reciprocal %32 {approx = true} : vector<16x32xf32> -> vector<16x32xf32>
    %35 = arith.mulf %33, %34 : vector<16x32xf32>
    %36 = arith.mulf %35, %35 : vector<16x32xf32>
    %cst_26 = arith.constant dense<0.000000e+00> : vector<16xf32>
    %37 = vector.multi_reduction <add>, %36, %cst_26 [1] : vector<16x32xf32> to vector<16xf32>
    %38 = vector.shape_cast %37 : vector<16xf32> to vector<16x1xf32>
    %39 = arith.mulf %4, %4 : vector<16x8xf32>
    %cst_27 = arith.constant dense<0.000000e+00> : vector<16xf32>
    %40 = vector.multi_reduction <add>, %39, %cst_27 [1] : vector<16x8xf32> to vector<16xf32>
    %41 = vector.shape_cast %40 : vector<16xf32> to vector<16x1xf32>
    %cst_28 = arith.constant 1.000000e-24 : f32
    %42 = vector.broadcast %cst_28 : f32 to vector<16x1xf32>
    %43 = arith.maximumf %38, %42 : vector<16x1xf32>
    %44 = math.rsqrt %43 : vector<16x1xf32>
    %45 = math.sqrt %41 : vector<16x1xf32>
    %46 = arith.mulf %44, %45 : vector<16x1xf32>
    %47 = vector.broadcast %10 : f32 to vector<16x1xf32>
    %48 = arith.mulf %46, %47 : vector<16x1xf32>
    %49 = vector.broadcast %48 : vector<16x1xf32> to vector<16x32xf32>
    %50 = arith.mulf %35, %49 : vector<16x32xf32>
    %51 = arith.addf %50, %8 : vector<16x32xf32>
    %cst_29 = arith.constant dense<0.000000e+00> : vector<16x64xf32>
    %52 = tpu.matmul %51, %11, %cst_29 {dimension_numbers = #tpu.dot_dimension_numbers<[1], [0], [0], [1], [0, 0, 1, 1], [], []>} : vector<16x32xf32>, vector<32x64xf32>, vector<16x64xf32> -> vector<16x64xf32>
    %cst_30 = arith.constant dense<0.000000e+00> : vector<64xf32>
    %53 = vector.multi_reduction <add>, %52, %cst_30 [0] : vector<16x64xf32> to vector<64xf32>
    %54 = vector.shape_cast %53 : vector<64xf32> to vector<1x64xf32>
    %cst_31 = arith.constant 1.600000e+01 : f32
    %55 = vector.broadcast %cst_31 : f32 to vector<1x64xf32>
    %56 = arith.divf %54, %55 : vector<1x64xf32>
    %57 = vector.broadcast %56 : vector<1x64xf32> to vector<16x64xf32>
    %58 = arith.subf %52, %57 : vector<16x64xf32>
    %59 = arith.mulf %58, %58 : vector<16x64xf32>
    %cst_32 = arith.constant dense<0.000000e+00> : vector<64xf32>
    %60 = vector.multi_reduction <add>, %59, %cst_32 [0] : vector<16x64xf32> to vector<64xf32>
    %61 = vector.shape_cast %60 : vector<64xf32> to vector<1x64xf32>
    %cst_33 = arith.constant 1.600000e+01 : f32
    %62 = vector.broadcast %cst_33 : f32 to vector<1x64xf32>
    %63 = arith.divf %61, %62 : vector<1x64xf32>
    %64 = vector.broadcast %56 : vector<1x64xf32> to vector<16x64xf32>
    %65 = arith.subf %52, %64 : vector<16x64xf32>
    %cst_34 = arith.constant 9.99999974E-6 : f32
    %66 = vector.broadcast %cst_34 : f32 to vector<1x64xf32>
    %67 = arith.addf %63, %66 : vector<1x64xf32>
    %68 = math.rsqrt %67 : vector<1x64xf32>
    %69 = vector.broadcast %68 : vector<1x64xf32> to vector<16x64xf32>
    %70 = arith.mulf %65, %69 : vector<16x64xf32>
    %71 = vector.broadcast %12 : vector<1x64xf32> to vector<16x64xf32>
    %72 = arith.mulf %70, %71 : vector<16x64xf32>
    %73 = vector.broadcast %13 : vector<1x64xf32> to vector<16x64xf32>
    %74 = arith.addf %72, %73 : vector<16x64xf32>
    %cst_35 = arith.constant 0.000000e+00 : f32
    %75 = vector.broadcast %cst_35 : f32 to vector<16x64xf32>
    %76 = arith.maximumf %74, %75 : vector<16x64xf32>
    %cst_36 = arith.constant dense<0.000000e+00> : vector<16x32xf32>
    %77 = tpu.matmul %76, %14, %cst_36 {dimension_numbers = #tpu.dot_dimension_numbers<[1], [0], [0], [1], [0, 0, 1, 1], [], []>} : vector<16x64xf32>, vector<64x32xf32>, vector<16x32xf32> -> vector<16x32xf32>
    %78 = math.tanh %77 : vector<16x32xf32>
    %c0_37 = arith.constant 0 : index
    %79 = memref.load %arg11[%c0_37] : memref<1xf32, #tpu.memory_space<smem>>
    %c0_38 = arith.constant 0 : index
    %80 = memref.load %arg12[%c0_38] : memref<1xf32, #tpu.memory_space<smem>>
    %c0_39 = arith.constant 0 : index
    %c0_40 = arith.constant 0 : index
    %81 = vector.load %arg13[%c0_39, %c0_40] : memref<32x64xf32, #tpu.memory_space<vmem>>, vector<32x64xf32>
    %c0_41 = arith.constant 0 : index
    %c0_42 = arith.constant 0 : index
    %82 = vector.load %arg14[%c0_41, %c0_42] : memref<1x64xf32, #tpu.memory_space<vmem>>, vector<1x64xf32>
    %c0_43 = arith.constant 0 : index
    %c0_44 = arith.constant 0 : index
    %83 = vector.load %arg15[%c0_43, %c0_44] : memref<1x64xf32, #tpu.memory_space<vmem>>, vector<1x64xf32>
    %c0_45 = arith.constant 0 : index
    %c0_46 = arith.constant 0 : index
    %84 = vector.load %arg16[%c0_45, %c0_46] : memref<64x32xf32, #tpu.memory_space<vmem>>, vector<64x32xf32>
    %cst_47 = arith.constant dense<0.000000e+00> : vector<32x32xf32>
    %85 = tpu.matmul %1, %78, %cst_47 {dimension_numbers = #tpu.dot_dimension_numbers<[1], [0], [0], [1], [0, 0, 1, 1], [], []>} : vector<32x16xf32>, vector<16x32xf32>, vector<32x32xf32> -> vector<32x32xf32>
    %cst_48 = arith.constant 0.000000e+00 : f32
    %86 = vector.broadcast %cst_48 : f32 to vector<32x32xf32>
    %87 = arith.maximumf %85, %86 : vector<32x32xf32>
    %cst_49 = arith.constant 1.000000e-07 : f32
    %88 = vector.broadcast %cst_49 : f32 to vector<32x32xf32>
    %89 = arith.addf %87, %88 : vector<32x32xf32>
    %90 = vector.broadcast %79 : f32 to vector<32x32xf32>
    %91 = arith.mulf %89, %90 : vector<32x32xf32>
    %cst_50 = arith.constant dense<0xFF800000> : vector<32xf32>
    %92 = vector.multi_reduction <maximumf>, %91, %cst_50 [0] : vector<32x32xf32> to vector<32xf32>
    %93 = vector.shape_cast %92 : vector<32xf32> to vector<1x32xf32>
    %94 = vector.broadcast %93 : vector<1x32xf32> to vector<32x32xf32>
    %95 = arith.subf %91, %94 : vector<32x32xf32>
    %96 = math.exp %95 : vector<32x32xf32>
    %97 = arith.mulf %96, %89 : vector<32x32xf32>
    %98 = tpu.concatenate %96, %97 in 1 : vector<32x32xf32>, vector<32x32xf32> -> vector<32x64xf32>
    %cst_51 = arith.constant dense<0.000000e+00> : vector<16x64xf32>
    %99 = tpu.matmul %3, %98, %cst_51 {dimension_numbers = #tpu.dot_dimension_numbers<[1], [0], [0], [1], [0, 0, 1, 1], [], []>} : vector<16x32xf32>, vector<32x64xf32>, vector<16x64xf32> -> vector<16x64xf32>
    %100 = vector.extract_strided_slice %99 {offsets = [0, 0], sizes = [16, 32], strides = [1, 1]} : vector<16x64xf32> to vector<16x32xf32>
    %cst_52 = arith.constant 9.99999996E-13 : f32
    %101 = vector.broadcast %cst_52 : f32 to vector<16x32xf32>
    %102 = arith.maximumf %100, %101 : vector<16x32xf32>
    %103 = vector.extract_strided_slice %99 {offsets = [0, 32], sizes = [16, 32], strides = [1, 1]} : vector<16x64xf32> to vector<16x32xf32>
    %104 = tpu.reciprocal %102 {approx = true} : vector<16x32xf32> -> vector<16x32xf32>
    %105 = arith.mulf %103, %104 : vector<16x32xf32>
    %106 = arith.mulf %105, %105 : vector<16x32xf32>
    %cst_53 = arith.constant dense<0.000000e+00> : vector<16xf32>
    %107 = vector.multi_reduction <add>, %106, %cst_53 [1] : vector<16x32xf32> to vector<16xf32>
    %108 = vector.shape_cast %107 : vector<16xf32> to vector<16x1xf32>
    %109 = arith.mulf %78, %78 : vector<16x32xf32>
    %cst_54 = arith.constant dense<0.000000e+00> : vector<16xf32>
    %110 = vector.multi_reduction <add>, %109, %cst_54 [1] : vector<16x32xf32> to vector<16xf32>
    %111 = vector.shape_cast %110 : vector<16xf32> to vector<16x1xf32>
    %cst_55 = arith.constant 1.000000e-24 : f32
    %112 = vector.broadcast %cst_55 : f32 to vector<16x1xf32>
    %113 = arith.maximumf %108, %112 : vector<16x1xf32>
    %114 = math.rsqrt %113 : vector<16x1xf32>
    %115 = math.sqrt %111 : vector<16x1xf32>
    %116 = arith.mulf %114, %115 : vector<16x1xf32>
    %117 = vector.broadcast %80 : f32 to vector<16x1xf32>
    %118 = arith.mulf %116, %117 : vector<16x1xf32>
    %119 = vector.broadcast %118 : vector<16x1xf32> to vector<16x32xf32>
    %120 = arith.mulf %105, %119 : vector<16x32xf32>
    %121 = arith.addf %120, %78 : vector<16x32xf32>
    %cst_56 = arith.constant dense<0.000000e+00> : vector<16x64xf32>
    %122 = tpu.matmul %121, %81, %cst_56 {dimension_numbers = #tpu.dot_dimension_numbers<[1], [0], [0], [1], [0, 0, 1, 1], [], []>} : vector<16x32xf32>, vector<32x64xf32>, vector<16x64xf32> -> vector<16x64xf32>
    %cst_57 = arith.constant dense<0.000000e+00> : vector<64xf32>
    %123 = vector.multi_reduction <add>, %122, %cst_57 [0] : vector<16x64xf32> to vector<64xf32>
    %124 = vector.shape_cast %123 : vector<64xf32> to vector<1x64xf32>
    %cst_58 = arith.constant 1.600000e+01 : f32
    %125 = vector.broadcast %cst_58 : f32 to vector<1x64xf32>
    %126 = arith.divf %124, %125 : vector<1x64xf32>
    %127 = vector.broadcast %126 : vector<1x64xf32> to vector<16x64xf32>
    %128 = arith.subf %122, %127 : vector<16x64xf32>
    %129 = arith.mulf %128, %128 : vector<16x64xf32>
    %cst_59 = arith.constant dense<0.000000e+00> : vector<64xf32>
    %130 = vector.multi_reduction <add>, %129, %cst_59 [0] : vector<16x64xf32> to vector<64xf32>
    %131 = vector.shape_cast %130 : vector<64xf32> to vector<1x64xf32>
    %cst_60 = arith.constant 1.600000e+01 : f32
    %132 = vector.broadcast %cst_60 : f32 to vector<1x64xf32>
    %133 = arith.divf %131, %132 : vector<1x64xf32>
    %134 = vector.broadcast %126 : vector<1x64xf32> to vector<16x64xf32>
    %135 = arith.subf %122, %134 : vector<16x64xf32>
    %cst_61 = arith.constant 9.99999974E-6 : f32
    %136 = vector.broadcast %cst_61 : f32 to vector<1x64xf32>
    %137 = arith.addf %133, %136 : vector<1x64xf32>
    %138 = math.rsqrt %137 : vector<1x64xf32>
    %139 = vector.broadcast %138 : vector<1x64xf32> to vector<16x64xf32>
    %140 = arith.mulf %135, %139 : vector<16x64xf32>
    %141 = vector.broadcast %82 : vector<1x64xf32> to vector<16x64xf32>
    %142 = arith.mulf %140, %141 : vector<16x64xf32>
    %143 = vector.broadcast %83 : vector<1x64xf32> to vector<16x64xf32>
    %144 = arith.addf %142, %143 : vector<16x64xf32>
    %cst_62 = arith.constant 0.000000e+00 : f32
    %145 = vector.broadcast %cst_62 : f32 to vector<16x64xf32>
    %146 = arith.maximumf %144, %145 : vector<16x64xf32>
    %cst_63 = arith.constant dense<0.000000e+00> : vector<16x32xf32>
    %147 = tpu.matmul %146, %84, %cst_63 {dimension_numbers = #tpu.dot_dimension_numbers<[1], [0], [0], [1], [0, 0, 1, 1], [], []>} : vector<16x64xf32>, vector<64x32xf32>, vector<16x32xf32> -> vector<16x32xf32>
    %148 = math.tanh %147 : vector<16x32xf32>
    %c0_64 = arith.constant 0 : index
    %149 = memref.load %arg17[%c0_64] : memref<1xf32, #tpu.memory_space<smem>>
    %c0_65 = arith.constant 0 : index
    %150 = memref.load %arg18[%c0_65] : memref<1xf32, #tpu.memory_space<smem>>
    %c0_66 = arith.constant 0 : index
    %c0_67 = arith.constant 0 : index
    %151 = vector.load %arg19[%c0_66, %c0_67] : memref<32x64xf32, #tpu.memory_space<vmem>>, vector<32x64xf32>
    %c0_68 = arith.constant 0 : index
    %c0_69 = arith.constant 0 : index
    %152 = vector.load %arg20[%c0_68, %c0_69] : memref<1x64xf32, #tpu.memory_space<vmem>>, vector<1x64xf32>
    %c0_70 = arith.constant 0 : index
    %c0_71 = arith.constant 0 : index
    %153 = vector.load %arg21[%c0_70, %c0_71] : memref<1x64xf32, #tpu.memory_space<vmem>>, vector<1x64xf32>
    %c0_72 = arith.constant 0 : index
    %c0_73 = arith.constant 0 : index
    %154 = vector.load %arg22[%c0_72, %c0_73] : memref<64x32xf32, #tpu.memory_space<vmem>>, vector<64x32xf32>
    %cst_74 = arith.constant dense<0.000000e+00> : vector<32x32xf32>
    %155 = tpu.matmul %1, %148, %cst_74 {dimension_numbers = #tpu.dot_dimension_numbers<[1], [0], [0], [1], [0, 0, 1, 1], [], []>} : vector<32x16xf32>, vector<16x32xf32>, vector<32x32xf32> -> vector<32x32xf32>
    %cst_75 = arith.constant 0.000000e+00 : f32
    %156 = vector.broadcast %cst_75 : f32 to vector<32x32xf32>
    %157 = arith.maximumf %155, %156 : vector<32x32xf32>
    %cst_76 = arith.constant 1.000000e-07 : f32
    %158 = vector.broadcast %cst_76 : f32 to vector<32x32xf32>
    %159 = arith.addf %157, %158 : vector<32x32xf32>
    %160 = vector.broadcast %149 : f32 to vector<32x32xf32>
    %161 = arith.mulf %159, %160 : vector<32x32xf32>
    %cst_77 = arith.constant dense<0xFF800000> : vector<32xf32>
    %162 = vector.multi_reduction <maximumf>, %161, %cst_77 [0] : vector<32x32xf32> to vector<32xf32>
    %163 = vector.shape_cast %162 : vector<32xf32> to vector<1x32xf32>
    %164 = vector.broadcast %163 : vector<1x32xf32> to vector<32x32xf32>
    %165 = arith.subf %161, %164 : vector<32x32xf32>
    %166 = math.exp %165 : vector<32x32xf32>
    %167 = arith.mulf %166, %159 : vector<32x32xf32>
    %168 = tpu.concatenate %166, %167 in 1 : vector<32x32xf32>, vector<32x32xf32> -> vector<32x64xf32>
    %cst_78 = arith.constant dense<0.000000e+00> : vector<16x64xf32>
    %169 = tpu.matmul %3, %168, %cst_78 {dimension_numbers = #tpu.dot_dimension_numbers<[1], [0], [0], [1], [0, 0, 1, 1], [], []>} : vector<16x32xf32>, vector<32x64xf32>, vector<16x64xf32> -> vector<16x64xf32>
    %170 = vector.extract_strided_slice %169 {offsets = [0, 0], sizes = [16, 32], strides = [1, 1]} : vector<16x64xf32> to vector<16x32xf32>
    %cst_79 = arith.constant 9.99999996E-13 : f32
    %171 = vector.broadcast %cst_79 : f32 to vector<16x32xf32>
    %172 = arith.maximumf %170, %171 : vector<16x32xf32>
    %173 = vector.extract_strided_slice %169 {offsets = [0, 32], sizes = [16, 32], strides = [1, 1]} : vector<16x64xf32> to vector<16x32xf32>
    %174 = tpu.reciprocal %172 {approx = true} : vector<16x32xf32> -> vector<16x32xf32>
    %175 = arith.mulf %173, %174 : vector<16x32xf32>
    %176 = arith.mulf %175, %175 : vector<16x32xf32>
    %cst_80 = arith.constant dense<0.000000e+00> : vector<16xf32>
    %177 = vector.multi_reduction <add>, %176, %cst_80 [1] : vector<16x32xf32> to vector<16xf32>
    %178 = vector.shape_cast %177 : vector<16xf32> to vector<16x1xf32>
    %179 = arith.mulf %148, %148 : vector<16x32xf32>
    %cst_81 = arith.constant dense<0.000000e+00> : vector<16xf32>
    %180 = vector.multi_reduction <add>, %179, %cst_81 [1] : vector<16x32xf32> to vector<16xf32>
    %181 = vector.shape_cast %180 : vector<16xf32> to vector<16x1xf32>
    %cst_82 = arith.constant 1.000000e-24 : f32
    %182 = vector.broadcast %cst_82 : f32 to vector<16x1xf32>
    %183 = arith.maximumf %178, %182 : vector<16x1xf32>
    %184 = math.rsqrt %183 : vector<16x1xf32>
    %185 = math.sqrt %181 : vector<16x1xf32>
    %186 = arith.mulf %184, %185 : vector<16x1xf32>
    %187 = vector.broadcast %150 : f32 to vector<16x1xf32>
    %188 = arith.mulf %186, %187 : vector<16x1xf32>
    %189 = vector.broadcast %188 : vector<16x1xf32> to vector<16x32xf32>
    %190 = arith.mulf %175, %189 : vector<16x32xf32>
    %191 = arith.addf %190, %148 : vector<16x32xf32>
    %cst_83 = arith.constant dense<0.000000e+00> : vector<16x64xf32>
    %192 = tpu.matmul %191, %151, %cst_83 {dimension_numbers = #tpu.dot_dimension_numbers<[1], [0], [0], [1], [0, 0, 1, 1], [], []>} : vector<16x32xf32>, vector<32x64xf32>, vector<16x64xf32> -> vector<16x64xf32>
    %cst_84 = arith.constant dense<0.000000e+00> : vector<64xf32>
    %193 = vector.multi_reduction <add>, %192, %cst_84 [0] : vector<16x64xf32> to vector<64xf32>
    %194 = vector.shape_cast %193 : vector<64xf32> to vector<1x64xf32>
    %cst_85 = arith.constant 1.600000e+01 : f32
    %195 = vector.broadcast %cst_85 : f32 to vector<1x64xf32>
    %196 = arith.divf %194, %195 : vector<1x64xf32>
    %197 = vector.broadcast %196 : vector<1x64xf32> to vector<16x64xf32>
    %198 = arith.subf %192, %197 : vector<16x64xf32>
    %199 = arith.mulf %198, %198 : vector<16x64xf32>
    %cst_86 = arith.constant dense<0.000000e+00> : vector<64xf32>
    %200 = vector.multi_reduction <add>, %199, %cst_86 [0] : vector<16x64xf32> to vector<64xf32>
    %201 = vector.shape_cast %200 : vector<64xf32> to vector<1x64xf32>
    %cst_87 = arith.constant 1.600000e+01 : f32
    %202 = vector.broadcast %cst_87 : f32 to vector<1x64xf32>
    %203 = arith.divf %201, %202 : vector<1x64xf32>
    %204 = vector.broadcast %196 : vector<1x64xf32> to vector<16x64xf32>
    %205 = arith.subf %192, %204 : vector<16x64xf32>
    %cst_88 = arith.constant 9.99999974E-6 : f32
    %206 = vector.broadcast %cst_88 : f32 to vector<1x64xf32>
    %207 = arith.addf %203, %206 : vector<1x64xf32>
    %208 = math.rsqrt %207 : vector<1x64xf32>
    %209 = vector.broadcast %208 : vector<1x64xf32> to vector<16x64xf32>
    %210 = arith.mulf %205, %209 : vector<16x64xf32>
    %211 = vector.broadcast %152 : vector<1x64xf32> to vector<16x64xf32>
    %212 = arith.mulf %210, %211 : vector<16x64xf32>
    %213 = vector.broadcast %153 : vector<1x64xf32> to vector<16x64xf32>
    %214 = arith.addf %212, %213 : vector<16x64xf32>
    %cst_89 = arith.constant 0.000000e+00 : f32
    %215 = vector.broadcast %cst_89 : f32 to vector<16x64xf32>
    %216 = arith.maximumf %214, %215 : vector<16x64xf32>
    %cst_90 = arith.constant dense<0.000000e+00> : vector<16x32xf32>
    %217 = tpu.matmul %216, %154, %cst_90 {dimension_numbers = #tpu.dot_dimension_numbers<[1], [0], [0], [1], [0, 0, 1, 1], [], []>} : vector<16x64xf32>, vector<64x32xf32>, vector<16x32xf32> -> vector<16x32xf32>
    %c0_91 = arith.constant 0 : index
    %c0_92 = arith.constant 0 : index
    %218 = vector.load %arg23[%c0_91, %c0_92] : memref<16x32xf32, #tpu.memory_space<vmem>>, vector<16x32xf32>
    tpu.vector_store %arg23[%c0_91, %c0_92], %217 {strides = array<i32>} : memref<16x32xf32, #tpu.memory_space<vmem>>, vector<16x32xf32>,
    return
  }
}

</mosaic_0001>

<llo_original>
// kernel: tpu_custom_call.1
$region0: #{tpu_custom_call.1}
  #allocation0 [shape = 'u32[]', space=smem, size = 0x4, offset = 0x4, fixed_abs, tag = 'smem constant byte address 0x4 - core index']
  #allocation1 [shape = 'u32[72,128]{1,0:T(1,128)}', space=vmem, size = 0x9000, scoped, tag = 'internal scratch']
  #allocation2 [shape = 'f32[1]{0:T(128)S(6)}', space=smem, size = 0x200, scoped, tag = 'scoped memory for tpu_custom_call.1']
  #allocation3 [shape = 'f32[1]{0:T(128)S(6)}', space=smem, size = 0x200, scoped, tag = 'scoped memory for tpu_custom_call.1']
  #allocation4 [shape = 'f32[1]{0:T(128)S(6)}', space=smem, size = 0x200, scoped, tag = 'scoped memory for tpu_custom_call.1']
  #allocation5 [shape = 'f32[1]{0:T(128)S(6)}', space=smem, size = 0x200, scoped, tag = 'scoped memory for tpu_custom_call.1']
  #allocation6 [shape = 'f32[1]{0:T(128)S(6)}', space=smem, size = 0x200, scoped, tag = 'scoped memory for tpu_custom_call.1']
  #allocation7 [shape = 'f32[1]{0:T(128)S(6)}', space=smem, size = 0x200, scoped, tag = 'scoped memory for tpu_custom_call.1']
  %s0 = inlined_call_operand.vmem [shape: f32[16,8], index: 0, kind: input, shape index: {}]
  %s1 = inlined_call_operand.vmem [shape: bf16[32,16], index: 1, kind: input, shape index: {}]
  %s2 = inlined_call_operand.vmem [shape: bf16[16,32], index: 2, kind: input, shape index: {}]
  %s3 = inlined_call_operand.vmem [shape: f32[8,32], index: 3, kind: input, shape index: {}]
  %s4 = inlined_call_operand.vmem [shape: f32[8,32], index: 4, kind: input, shape index: {}]
  %s5 = inlined_call_operand.<no memory space> [shape: f32[1], index: 5, kind: input, shape index: {}]
  %s6 = inlined_call_operand.<no memory space> [shape: f32[1], index: 6, kind: input, shape index: {}]
  %s7 = inlined_call_operand.vmem [shape: f32[32,64], index: 7, kind: input, shape index: {}]
  %s8 = inlined_call_operand.vmem [shape: f32[1,64], index: 8, kind: input, shape index: {}]
  %s9 = inlined_call_operand.vmem [shape: f32[1,64], index: 9, kind: input, shape index: {}]
  %s10 = inlined_call_operand.vmem [shape: f32[64,32], index: 10, kind: input, shape index: {}]
  %s11 = inlined_call_operand.<no memory space> [shape: f32[1], index: 11, kind: input, shape index: {}]
  %s12 = inlined_call_operand.<no memory space> [shape: f32[1], index: 12, kind: input, shape index: {}]
  %s13 = inlined_call_operand.vmem [shape: f32[32,64], index: 13, kind: input, shape index: {}]
  %s14 = inlined_call_operand.vmem [shape: f32[1,64], index: 14, kind: input, shape index: {}]
  %s15 = inlined_call_operand.vmem [shape: f32[1,64], index: 15, kind: input, shape index: {}]
  %s16 = inlined_call_operand.vmem [shape: f32[64,32], index: 16, kind: input, shape index: {}]
  %s17 = inlined_call_operand.<no memory space> [shape: f32[1], index: 17, kind: input, shape index: {}]
  %s18 = inlined_call_operand.<no memory space> [shape: f32[1], index: 18, kind: input, shape index: {}]
  %s19 = inlined_call_operand.vmem [shape: f32[32,64], index: 19, kind: input, shape index: {}]
  %s20 = inlined_call_operand.vmem [shape: f32[1,64], index: 20, kind: input, shape index: {}]
  %s21 = inlined_call_operand.vmem [shape: f32[1,64], index: 21, kind: input, shape index: {}]
  %s22 = inlined_call_operand.vmem [shape: f32[64,32], index: 22, kind: input, shape index: {}]
  %s23 = inlined_call_operand.hbm [shape: f32[16,32], index: 23, kind: output, shape index: {}]
  %s24 = sld [smem:[#allocation0]]
  $region102: #{tpu_custom_call.1} parent=0
    _
  %s26 = ssub.s32 1, %s24
  %s27 = scalar_select 0, %s26, %s24
  %28 = sst [smem:[#allocation2]] %s5
  %29 = sst [smem:[#allocation3]] %s6
  %30 = sst [smem:[#allocation4]] %s11
  %31 = sst [smem:[#allocation5]] %s12
  %32 = sst [smem:[#allocation6]] %s17
  %33 = sst [smem:[#allocation7]] %s18
  $region1: #{tpu_custom_call.1} parent=0
    #allocation8 [shape = 'u8[8192]{0}', space=vmem, size = 0x2000, scoped, tag = 'output window, operand 0, single buffered']
    #allocation9 [shape = 's32[1]{0}', space=sflag, size = 0x4, scoped, tag = 'scoped memory for tpu_custom_call.1']
    %34 = vsyncpa [#allocation9], 0
    // Predicated region
    $region2: #{tpu_custom_call.1} parent=1 // pred_check
      _
    $region3: #{tpu_custom_call.1} parent=1 // pred_check_branch
      %36 = sbr.rel (0) target = $region5
    $region4: #{tpu_custom_call.1} parent=1 // pred_region
      _
    $region5: #{tpu_custom_call.1} parent=1 // pred_fallthru
      _
    // Predicated region
    $region6: #{tpu_custom_call.1} parent=1 // pred_check
      _
    $region7: #{tpu_custom_call.1} parent=1 // pred_check_branch
      %38 = sbr.rel (0) target = $region9
    $region8: #{tpu_custom_call.1} parent=1 // pred_region
      _
    $region9: #{tpu_custom_call.1} parent=1 // pred_fallthru
      _
    // Predicated region
    $region10: #{tpu_custom_call.1} parent=1 // pred_check
      _
    $region11: #{tpu_custom_call.1} parent=1 // pred_check_branch
      %40 = sbr.rel (0) target = $region13
    $region12: #{tpu_custom_call.1} parent=1 // pred_region
      _
    $region13: #{tpu_custom_call.1} parent=1 // pred_fallthru
      _
    // Predicated region
    $region14: #{tpu_custom_call.1} parent=1 // pred_check
      _
    $region15: #{tpu_custom_call.1} parent=1 // pred_check_branch
      %42 = sbr.rel (0) target = $region17
    $region16: #{tpu_custom_call.1} parent=1 // pred_region
      _
    $region17: #{tpu_custom_call.1} parent=1 // pred_fallthru
      _
    // Predicated region
    $region18: #{tpu_custom_call.1} parent=1 // pred_check
      _
    $region19: #{tpu_custom_call.1} parent=1 // pred_check_branch
      %44 = sbr.rel (0) target = $region21
    $region20: #{tpu_custom_call.1} parent=1 // pred_region
      _
    $region21: #{tpu_custom_call.1} parent=1 // pred_fallthru
      _
    // Predicated region
    $region22: #{tpu_custom_call.1} parent=1 // pred_check
      _
    $region23: #{tpu_custom_call.1} parent=1 // pred_check_branch
      %46 = sbr.rel (0) target = $region25
    $region24: #{tpu_custom_call.1} parent=1 // pred_region
      _
    $region25: #{tpu_custom_call.1} parent=1 // pred_fallthru
      _
    // Predicated region
    $region26: #{tpu_custom_call.1} parent=1 // pred_check
      _
    $region27: #{tpu_custom_call.1} parent=1 // pred_check_branch
      %48 = sbr.rel (0) target = $region29
    $region28: #{tpu_custom_call.1} parent=1 // pred_region
      _
    $region29: #{tpu_custom_call.1} parent=1 // pred_fallthru
      _
    // Predicated region
    $region30: #{tpu_custom_call.1} parent=1 // pred_check
      _
    $region31: #{tpu_custom_call.1} parent=1 // pred_check_branch
      %50 = sbr.rel (0) target = $region33
    $region32: #{tpu_custom_call.1} parent=1 // pred_region
      _
    $region33: #{tpu_custom_call.1} parent=1 // pred_fallthru
      _
    // Predicated region
    $region34: #{tpu_custom_call.1} parent=1 // pred_check
      _
    $region35: #{tpu_custom_call.1} parent=1 // pred_check_branch
      %52 = sbr.rel (0) target = $region37
    $region36: #{tpu_custom_call.1} parent=1 // pred_region
      _
    $region37: #{tpu_custom_call.1} parent=1 // pred_fallthru
      _
    // Predicated region
    $region38: #{tpu_custom_call.1} parent=1 // pred_check
      _
    $region39: #{tpu_custom_call.1} parent=1 // pred_check_branch
      %54 = sbr.rel (0) target = $region41
    $region40: #{tpu_custom_call.1} parent=1 // pred_region
      _
    $region41: #{tpu_custom_call.1} parent=1 // pred_fallthru
      _
    // Predicated region
    $region42: #{tpu_custom_call.1} parent=1 // pred_check
      _
    $region43: #{tpu_custom_call.1} parent=1 // pred_check_branch
      %56 = sbr.rel (0) target = $region45
    $region44: #{tpu_custom_call.1} parent=1 // pred_region
      _
    $region45: #{tpu_custom_call.1} parent=1 // pred_fallthru
      _
    // Predicated region
    $region46: #{tpu_custom_call.1} parent=1 // pred_check
      _
    $region47: #{tpu_custom_call.1} parent=1 // pred_check_branch
      %58 = sbr.rel (0) target = $region49
    $region48: #{tpu_custom_call.1} parent=1 // pred_region
      _
    $region49: #{tpu_custom_call.1} parent=1 // pred_fallthru
      _
    // Predicated region
    $region50: #{tpu_custom_call.1} parent=1 // pred_check
      _
    $region51: #{tpu_custom_call.1} parent=1 // pred_check_branch
      %60 = sbr.rel (0) target = $region53
    $region52: #{tpu_custom_call.1} parent=1 // pred_region
      _
    $region53: #{tpu_custom_call.1} parent=1 // pred_fallthru
      _
    // Predicated region
    $region54: #{tpu_custom_call.1} parent=1 // pred_check
      _
    $region55: #{tpu_custom_call.1} parent=1 // pred_check_branch
      %62 = sbr.rel (0) target = $region57
    $region56: #{tpu_custom_call.1} parent=1 // pred_region
      _
    $region57: #{tpu_custom_call.1} parent=1 // pred_fallthru
      _
    // Predicated region
    $region58: #{tpu_custom_call.1} parent=1 // pred_check
      _
    $region59: #{tpu_custom_call.1} parent=1 // pred_check_branch
      %64 = sbr.rel (0) target = $region61
    $region60: #{tpu_custom_call.1} parent=1 // pred_region
      _
    $region61: #{tpu_custom_call.1} parent=1 // pred_fallthru
      _
    // Predicated region
    $region62: #{tpu_custom_call.1} parent=1 // pred_check
      _
    $region63: #{tpu_custom_call.1} parent=1 // pred_check_branch
      %66 = sbr.rel (0) target = $region65
    $region64: #{tpu_custom_call.1} parent=1 // pred_region
      _
    $region65: #{tpu_custom_call.1} parent=1 // pred_fallthru
      _
    // Predicated region
    $region66: #{tpu_custom_call.1} parent=1 // pred_check
      _
    $region67: #{tpu_custom_call.1} parent=1 // pred_check_branch
      %68 = sbr.rel (0) target = $region69
    $region68: #{tpu_custom_call.1} parent=1 // pred_region
      _
    $region69: #{tpu_custom_call.1} parent=1 // pred_fallthru
      _
    // Predicated region
    $region70: #{tpu_custom_call.1} parent=1 // pred_check
      _
    $region71: #{tpu_custom_call.1} parent=1 // pred_check_branch
      %70 = sbr.rel (0) target = $region73
    $region72: #{tpu_custom_call.1} parent=1 // pred_region
      _
    $region73: #{tpu_custom_call.1} parent=1 // pred_fallthru
      _
    // Predicated region
    $region74: #{tpu_custom_call.1} parent=1 // pred_check
      _
    $region75: #{tpu_custom_call.1} parent=1 // pred_check_branch
      %72 = sbr.rel (0) target = $region77
    $region76: #{tpu_custom_call.1} parent=1 // pred_region
      _
    $region77: #{tpu_custom_call.1} parent=1 // pred_fallthru
      _
    // Predicated region
    $region78: #{tpu_custom_call.1} parent=1 // pred_check
      _
    $region79: #{tpu_custom_call.1} parent=1 // pred_check_branch
      %74 = sbr.rel (0) target = $region81
    $region80: #{tpu_custom_call.1} parent=1 // pred_region
      _
    $region81: #{tpu_custom_call.1} parent=1 // pred_fallthru
      _
    // Predicated region
    $region82: #{tpu_custom_call.1} parent=1 // pred_check
      _
    $region83: #{tpu_custom_call.1} parent=1 // pred_check_branch
      %76 = sbr.rel (0) target = $region85
    $region84: #{tpu_custom_call.1} parent=1 // pred_region
      _
    $region85: #{tpu_custom_call.1} parent=1 // pred_fallthru
      _
    // Predicated region
    $region86: #{tpu_custom_call.1} parent=1 // pred_check
      _
    $region87: #{tpu_custom_call.1} parent=1 // pred_check_branch
      %78 = sbr.rel (0) target = $region89
    $region88: #{tpu_custom_call.1} parent=1 // pred_region
      _
    $region89: #{tpu_custom_call.1} parent=1 // pred_fallthru
      _
    // Predicated region
    $region90: #{tpu_custom_call.1} parent=1 // pred_check
      _
    $region91: #{tpu_custom_call.1} parent=1 // pred_check_branch
      %80 = sbr.rel (0) target = $region93
    $region92: #{tpu_custom_call.1} parent=1 // pred_region
      _
    $region93: #{tpu_custom_call.1} parent=1 // pred_fallthru
      _
    %v81 = vld [vmem:[%s1] sm:$0xf]
    %v82 = vld [vmem:[%s1 + $0x4] sm:$0xf]
    %v83 = vld [vmem:[%s1 + $0x8] sm:$0xf]
    %v84 = vld [vmem:[%s1 + $0xc] sm:$0xf]
    %v85 = vunpack.c.l.bf16 %v81
    %v86 = vunpack.c.l.bf16 %v82
    %v87 = vunpack.c.l.bf16 %v83
    %v88 = vunpack.c.l.bf16 %v84
    %v89 = vld [vmem:[%s2] sm:$0xf]
    %v90 = vld [vmem:[%s2 + $0x4] sm:$0xf]
    %v91 = vunpack.c.l.bf16 %v89
    %v92 = vunpack.c.l.bf16 %v90
    %v93 = vld [vmem:[%s0] sm:$0xff]
    %v94 = vld [vmem:[%s0 + $0x8] sm:$0xff]
    %v95 = vld [vmem:[%s3] sm:$0xff]
    %vm96 = vcmask 64512
    %v98 = vsel %vm96, %v93, 0
    %v101 = vsel %vm96, %v94, 0
    %103 = vmatpush.msra.mxu0 0.0
    %104 = vmatpush.msra.mxu0 0.0
    %105 = vmatpush.msra.mxu0 0.0
    %106 = vmatpush.msra.mxu0 0.0
    %107 = vmatpush.msra.mxu0 0.0
    %108 = vmatpush.msra.mxu0 0.0
    %109 = vmatpush.msra.mxu0 0.0
    %110 = vmatpush.msra.mxu0 0.0
    %111 = vmatpush.msra.mxu0 0.0
    %112 = vmatpush.msra.mxu0 0.0
    %113 = vmatpush.msra.mxu0 0.0
    %114 = vmatpush.msra.mxu0 0.0
    %115 = vmatpush.msra.mxu0 0.0
    %116 = vmatpush.msra.mxu0 0.0
    %117 = vmatpush.msra.mxu0 0.0
    %118 = vmatpush.msra.mxu0 %v95
    %119 = vmatmul.f32.gmra.mxu0 %v98
    %v120 = vpop.f32.mrf.mxu0
    %v121 = vadd.f32 0.0, %v120
    %122 = vmatmul.f32.gmra.mxu0 %v101
    %v123 = vpop.f32.mrf.mxu0
    %v124 = vadd.f32 0.0, %v123
    %125 = vdwg.mxu0
    %v126 = vld [vmem:[%s4] sm:$0xff]
    %127 = vmatpush.msra.mxu0 0.0
    %128 = vmatpush.msra.mxu0 0.0
    %129 = vmatpush.msra.mxu0 0.0
    %130 = vmatpush.msra.mxu0 0.0
    %131 = vmatpush.msra.mxu0 0.0
    %132 = vmatpush.msra.mxu0 0.0
    %133 = vmatpush.msra.mxu0 0.0
    %134 = vmatpush.msra.mxu0 0.0
    %135 = vmatpush.msra.mxu0 0.0
    %136 = vmatpush.msra.mxu0 0.0
    %137 = vmatpush.msra.mxu0 0.0
    %138 = vmatpush.msra.mxu0 0.0
    %139 = vmatpush.msra.mxu0 0.0
    %140 = vmatpush.msra.mxu0 0.0
    %141 = vmatpush.msra.mxu0 0.0
    %142 = vmatpush.msra.mxu0 %v126
    %143 = vmatmul.f32.gmra.mxu0 %v98
    %v144 = vpop.f32.mrf.mxu0
    %v145 = vadd.f32 0.0, %v144
    %146 = vmatmul.f32.gmra.mxu0 %v101
    %v147 = vpop.f32.mrf.mxu0
    %v148 = vadd.f32 0.0, %v147
    %149 = vdwg.mxu0
    %s150 = sld [smem:[#allocation2]]
    %s151 = sld [smem:[#allocation3]]
    %v152 = vld [vmem:[%s7] sm:$0xff]
    %v153 = vld [vmem:[%s7 + $0x8] sm:$0xff]
    %v154 = vld [vmem:[%s7 + $0x10] sm:$0xff]
    %v155 = vld [vmem:[%s7 + $0x18] sm:$0xff]
    %v156 = vld [vmem:[%s8] sm:$0x1]
    %v157 = vld [vmem:[%s9] sm:$0x1]
    %v158 = vld [vmem:[%s10] sm:$0xff]
    %v159 = vld [vmem:[%s10 + $0x8] sm:$0xff]
    %v160 = vld [vmem:[%s10 + $0x10] sm:$0xff]
    %v161 = vld [vmem:[%s10 + $0x18] sm:$0xff]
    %v162 = vld [vmem:[%s10 + $0x20] sm:$0xff]
    %v163 = vld [vmem:[%s10 + $0x28] sm:$0xff]
    %v164 = vld [vmem:[%s10 + $0x30] sm:$0xff]
    %v165 = vld [vmem:[%s10 + $0x38] sm:$0xff]
    %vm166 = vcmask 130048
    %v168 = vsel %vm166, %v85, 0
    %v171 = vsel %vm166, %v86, 0
    %v174 = vsel %vm166, %v87, 0
    %v177 = vsel %vm166, %v88, 0
    %179 = vmatpush.msra.mxu0 0.0
    %180 = vmatpush.msra.mxu0 0.0
    %181 = vmatpush.msra.mxu0 0.0
    %182 = vmatpush.msra.mxu0 0.0
    %183 = vmatpush.msra.mxu0 0.0
    %184 = vmatpush.msra.mxu0 0.0
    %185 = vmatpush.msra.mxu0 0.0
    %186 = vmatpush.msra.mxu0 0.0
    %187 = vmatpush.msra.mxu0 0.0
    %188 = vmatpush.msra.mxu0 0.0
    %189 = vmatpush.msra.mxu0 0.0
    %190 = vmatpush.msra.mxu0 0.0
    %191 = vmatpush.msra.mxu0 0.0
    %192 = vmatpush.msra.mxu0 0.0
    %193 = vmatpush.msra.mxu0 %v124
    %194 = vmatpush.msra.mxu0 %v121
    %195 = vmatmul.f32.gmra.mxu0 %v168
    %v196 = vpop.f32.mrf.mxu0
    %v197 = vadd.f32 0.0, %v196
    %198 = vmatmul.f32.gmra.mxu0 %v171
    %v199 = vpop.f32.mrf.mxu0
    %v200 = vadd.f32 0.0, %v199
    %201 = vmatmul.f32.gmra.mxu0 %v174
    %v202 = vpop.f32.mrf.mxu0
    %v203 = vadd.f32 0.0, %v202
    %204 = vmatmul.f32.gmra.mxu0 %v177
    %v205 = vpop.f32.mrf.mxu0
    %v206 = vadd.f32 0.0, %v205
    %207 = vdwg.mxu0
    %v208 = vmax.f32 %v197, 0.0
    %v209 = vmax.f32 %v200, 0.0
    %v210 = vmax.f32 %v203, 0.0
    %v211 = vmax.f32 %v206, 0.0
    %v212 = vadd.f32 %v208, 1e-07
    %v213 = vadd.f32 %v209, 1e-07
    %v214 = vadd.f32 %v210, 1e-07
    %v215 = vadd.f32 %v211, 1e-07
    %v216 = vstv %s150
    %v217 = vmul.f32 %v212, %v216
    %v218 = vmul.f32 %v213, %v216
    %v219 = vmul.f32 %v214, %v216
    %v220 = vmul.f32 %v215, %v216
    %vm221 = vcmask 261120
    %v222 = vsel %vm221, %v217, -inf
    %v223 = vsel %vm221, %v218, -inf
    %v224 = vsel %vm221, %v219, -inf
    %v225 = vsel %vm221, %v220, -inf
    %v226 = vmax.f32 %v222, %v223
    %v227 = vmax.f32 %v224, %v225
    %v228 = vmax.f32 %v226, %v227
    %v229 = vrot.slane %v228, 4
    %v230 = vmax.f32 %v228, %v229
    %v231 = vrot.slane %v230, 2
    %v232 = vmax.f32 %v230, %v231
    %v233 = vrot.slane %v232, 1
    %v234 = vmax.f32 %v232, %v233
    %v235 = vsub.f32 %v217, %v234
    %v236 = vsub.f32 %v218, %v234
    %v237 = vsub.f32 %v219, %v234
    %v238 = vsub.f32 %v220, %v234
    %v239 = vmul.f32 %v235, 1.442695
    %v240 = vpow.pop %v239
    %v241 = vmul.f32 %v236, 1.442695
    %v242 = vpow.pop %v241
    %v243 = vmul.f32 %v237, 1.442695
    %v244 = vpow.pop %v243
    %v245 = vmul.f32 %v238, 1.442695
    %v246 = vpow.pop %v245
    %v247 = vmul.f32 %v240, %v212
    %v248 = vmul.f32 %v242, %v213
    %v249 = vmul.f32 %v244, %v214
    %v250 = vmul.f32 %v246, %v215
    %255 = vrot.lane.b32.xlu0 %v247, 32
    %v256 = vpop.permute.xlu0 %255
    %257 = vrot.lane.b32.xlu0 %v248, 32
    %v258 = vpop.permute.xlu0 %257
    %259 = vrot.lane.b32.xlu0 %v249, 32
    %v260 = vpop.permute.xlu0 %259
    %261 = vrot.lane.b32.xlu0 %v250, 32
    %v262 = vpop.permute.xlu0 %261
    %v267 = vsel %vm221, %v240, %v256
    %v268 = vsel %vm221, %v242, %v258
    %v269 = vsel %vm221, %v244, %v260
    %v270 = vsel %vm221, %v246, %v262
    %v272 = vsel %vm221, %v91, 0
    %v275 = vsel %vm221, %v92, 0
    %277 = vmatpush.msra.mxu0 0.0
    %278 = vmatpush.msra.mxu0 0.0
    %279 = vmatpush.msra.mxu0 0.0
    %280 = vmatpush.msra.mxu0 0.0
    %281 = vmatpush.msra.mxu0 0.0
    %282 = vmatpush.msra.mxu0 0.0
    %283 = vmatpush.msra.mxu0 0.0
    %284 = vmatpush.msra.mxu0 0.0
    %285 = vmatpush.msra.mxu0 0.0
    %286 = vmatpush.msra.mxu0 0.0
    %287 = vmatpush.msra.mxu0 0.0
    %288 = vmatpush.msra.mxu0 0.0
    %289 = vmatpush.msra.mxu0 %v270
    %290 = vmatpush.msra.mxu0 %v269
    %291 = vmatpush.msra.mxu0 %v268
    %292 = vmatpush.msra.mxu0 %v267
    %293 = vmatmul.f32.gmra.mxu0 %v272
    %v294 = vpop.f32.mrf.mxu0
    %v295 = vadd.f32 0.0, %v294
    %296 = vmatmul.f32.gmra.mxu0 %v275
    %v297 = vpop.f32.mrf.mxu0
    %v298 = vadd.f32 0.0, %v297
    %299 = vdwg.mxu0
    %v300 = vmax.f32 %v295, 1e-12
    %v301 = vmax.f32 %v298, 1e-12
    %v302 = vrcp.pop %v300
    %v303 = vrcp.pop %v301
    %306 = vrot.lane.b32.xlu0 %v302, 32
    %v307 = vpop.permute.xlu0 %306
    %308 = vrot.lane.b32.xlu0 %v303, 32
    %v309 = vpop.permute.xlu0 %308
    %v312 = vmul.f32 %v295, %v307
    %v313 = vmul.f32 %v298, %v309
    %v314 = vmul.f32 %v312, %v312
    %v315 = vmul.f32 %v313, %v313
    %318 = vrot.lane.b32.xlu0 %v314, 96
    %v319 = vpop.permute.xlu0 %318
    %320 = vrot.lane.b32.xlu0 %v315, 96
    %v321 = vpop.permute.xlu0 %320
    %v324 = vsel %vm221, %v319, 0.0
    %325 = vadd.xlane.f32.xlu0 %v324
    %v326 = vpop.xlane.xlu0 %325
    %v327 = vsel %vm221, %v321, 0.0
    %328 = vadd.xlane.f32.xlu0 %v327
    %v329 = vpop.xlane.xlu0 %328
    %v330 = vmul.f32 %v93, %v93
    %v331 = vmul.f32 %v94, %v94
    %v332 = vsel %vm96, %v330, 0.0
    %333 = vadd.xlane.f32.xlu0 %v332
    %v334 = vpop.xlane.xlu0 %333
    %v335 = vsel %vm96, %v331, 0.0
    %336 = vadd.xlane.f32.xlu0 %v335
    %v337 = vpop.xlane.xlu0 %336
    %v338 = vmax.f32 %v326, 1e-24
    %v339 = vmax.f32 %v329, 1e-24
    %v340 = vrsqrt.pop %v338
    %v341 = vmul.f32 %v340, %v338
    %v342 = vmul.f32 %v341, %v340
    %v343 = vmul.f32 0.5, %v342
    %v344 = vsub.f32 1.5, %v343
    %v345 = vmul.f32 %v340, %v344
    %vm346 = vweird.f32 %v338
    %vm347 = vweird.f32 %v340
    %vm348 = vmor %vm346, %vm347
    %v349 = vsel %vm348, %v340, %v345
    %v350 = vrsqrt.pop %v339
    %v351 = vmul.f32 %v350, %v339
    %v352 = vmul.f32 %v351, %v350
    %v353 = vmul.f32 0.5, %v352
    %v354 = vsub.f32 1.5, %v353
    %v355 = vmul.f32 %v350, %v354
    %vm356 = vweird.f32 %v339
    %vm357 = vweird.f32 %v350
    %vm358 = vmor %vm356, %vm357
    %v359 = vsel %vm358, %v350, %v355
    %v360 = vrsqrt.pop %v334
    %v361 = vmul.f32 %v360, %v334
    %v362 = vmul.f32 %v361, %v360
    %v363 = vmul.f32 0.5, %v362
    %v364 = vsub.f32 1.5, %v363
    %v365 = vmul.f32 %v360, %v364
    %v366 = vmul.f32 %v334, %v365
    %vm367 = vcmp.eq.f32.partialorder %v334, inf
    %v368 = vsel %vm367, %v334, %v366
    %vm369 = vcmp.eq.f32.partialorder %v334, 0.0
    %v370 = vand.u32 %v334, 2147483648
    %v371 = vsel %vm369, %v370, %v368
    %v372 = vrsqrt.pop %v337
    %v373 = vmul.f32 %v372, %v337
    %v374 = vmul.f32 %v373, %v372
    %v375 = vmul.f32 0.5, %v374
    %v376 = vsub.f32 1.5, %v375
    %v377 = vmul.f32 %v372, %v376
    %v378 = vmul.f32 %v337, %v377
    %vm379 = vcmp.eq.f32.partialorder %v337, inf
    %v380 = vsel %vm379, %v337, %v378
    %vm381 = vcmp.eq.f32.partialorder %v337, 0.0
    %v382 = vand.u32 %v337, 2147483648
    %v383 = vsel %vm381, %v382, %v380
    %v384 = vmul.f32 %v349, %v371
    %v385 = vmul.f32 %v359, %v383
    %v386 = vstv %s151
    %v387 = vmul.f32 %v384, %v386
    %v388 = vmul.f32 %v385, %v386
    %v389 = vmul.f32 %v312, %v387
    %v390 = vmul.f32 %v313, %v388
    %393 = vrot.lane.b32.xlu0 %v145, 32
    %v394 = vpop.permute.xlu0 %393
    %395 = vrot.lane.b32.xlu0 %v148, 32
    %v396 = vpop.permute.xlu0 %395
    %v399 = vadd.f32 %v389, %v394
    %v400 = vadd.f32 %v390, %v396
    %403 = vrot.lane.b32.xlu0 %v399, 96
    %v404 = vpop.permute.xlu0 %403
    %405 = vrot.lane.b32.xlu0 %v400, 96
    %v406 = vpop.permute.xlu0 %405
    %v407 = vsel %vm221, %v404, 0
    %v409 = vsel %vm221, %v406, 0
    %411 = vmatpush.msra.mxu0 0.0
    %412 = vmatpush.msra.mxu0 0.0
    %413 = vmatpush.msra.mxu0 0.0
    %414 = vmatpush.msra.mxu0 0.0
    %415 = vmatpush.msra.mxu0 0.0
    %416 = vmatpush.msra.mxu0 0.0
    %417 = vmatpush.msra.mxu0 0.0
    %418 = vmatpush.msra.mxu0 0.0
    %419 = vmatpush.msra.mxu0 0.0
    %420 = vmatpush.msra.mxu0 0.0
    %421 = vmatpush.msra.mxu0 0.0
    %422 = vmatpush.msra.mxu0 0.0
    %423 = vmatpush.msra.mxu0 %v155
    %424 = vmatpush.msra.mxu0 %v154
    %425 = vmatpush.msra.mxu0 %v153
    %426 = vmatpush.msra.mxu0 %v152
    %427 = vmatmul.f32.gmra.mxu0 %v407
    %v428 = vpop.f32.mrf.mxu0
    %v429 = vadd.f32 0.0, %v428
    %430 = vmatmul.f32.gmra.mxu0 %v409
    %v431 = vpop.f32.mrf.mxu0
    %v432 = vadd.f32 0.0, %v431
    %433 = vdwg.mxu0
    %vm434 = vcmask 523264
    %v435 = vsel %vm434, %v429, 0.0
    %v436 = vsel %vm434, %v432, 0.0
    %v437 = vadd.f32 %v435, %v436
    %v438 = vrot.slane %v437, 4
    %v439 = vadd.f32 %v437, %v438
    %v440 = vrot.slane %v439, 2
    %v441 = vadd.f32 %v439, %v440
    %v442 = vrot.slane %v441, 1
    %v443 = vadd.f32 %v441, %v442
    %v444 = vrcp.pop 16.0
    %v445 = vmul.f32 16.0, %v444
    %v446 = vsub.f32 1.0, %v445
    %v447 = vmul.f32 %v444, %v446
    %v448 = vadd.f32 %v444, %v447
    %vm449 = vweird.f32 %v444
    %v450 = vsel %vm449, %v444, %v448
    %v451 = vmul.f32 %v443, %v450
    %v452 = vsub.f32 %v429, %v451
    %v453 = vsub.f32 %v432, %v451
    %v454 = vmul.f32 %v452, %v452
    %v455 = vmul.f32 %v453, %v453
    %v456 = vsel %vm434, %v454, 0.0
    %v457 = vsel %vm434, %v455, 0.0
    %v458 = vadd.f32 %v456, %v457
    %v459 = vrot.slane %v458, 4
    %v460 = vadd.f32 %v458, %v459
    %v461 = vrot.slane %v460, 2
    %v462 = vadd.f32 %v460, %v461
    %v463 = vrot.slane %v462, 1
    %v464 = vadd.f32 %v462, %v463
    %v465 = vmul.f32 %v464, %v450
    %v466 = vadd.f32 %v465, 1e-05
    %v467 = vrsqrt.pop %v466
    %v468 = vmul.f32 %v467, %v466
    %v469 = vmul.f32 %v468, %v467
    %v470 = vmul.f32 0.5, %v469
    %v471 = vsub.f32 1.5, %v470
    %v472 = vmul.f32 %v467, %v471
    %vm473 = vweird.f32 %v466
    %vm474 = vweird.f32 %v467
    %vm475 = vmor %vm473, %vm474
    %v476 = vsel %vm475, %v467, %v472
    %v477 = vmul.f32 %v452, %v476
    %v478 = vmul.f32 %v453, %v476
    %v480 = vperm.slane %v156, 0
    %v482 = vmul.f32 %v477, %v480
    %v483 = vmul.f32 %v478, %v480
    %v485 = vperm.slane %v157, 0
    %v487 = vadd.f32 %v482, %v485
    %v488 = vadd.f32 %v483, %v485
    %v489 = vmax.f32 %v487, 0.0
    %v490 = vmax.f32 %v488, 0.0
    %v492 = vsel %vm434, %v489, 0
    %v495 = vsel %vm434, %v490, 0
    %497 = vmatpush.msra.mxu0 0.0
    %498 = vmatpush.msra.mxu0 0.0
    %499 = vmatpush.msra.mxu0 0.0
    %500 = vmatpush.msra.mxu0 0.0
    %501 = vmatpush.msra.mxu0 0.0
    %502 = vmatpush.msra.mxu0 0.0
    %503 = vmatpush.msra.mxu0 0.0
    %504 = vmatpush.msra.mxu0 0.0
    %505 = vmatpush.msra.mxu0 %v165
    %506 = vmatpush.msra.mxu0 %v164
    %507 = vmatpush.msra.mxu0 %v163
    %508 = vmatpush.msra.mxu0 %v162
    %509 = vmatpush.msra.mxu0 %v161
    %510 = vmatpush.msra.mxu0 %v160
    %511 = vmatpush.msra.mxu0 %v159
    %512 = vmatpush.msra.mxu0 %v158
    %513 = vmatmul.f32.gmra.mxu0 %v492
    %v514 = vpop.f32.mrf.mxu0
    %v515 = vadd.f32 0.0, %v514
    %516 = vmatmul.f32.gmra.mxu0 %v495
    %v517 = vpop.f32.mrf.mxu0
    %v518 = vadd.f32 0.0, %v517
    %519 = vdwg.mxu0
    %v520 = vtanh.pop %v515
    %v521 = vtanh.pop %v518
    %s522 = sld [smem:[#allocation4]]
    %s523 = sld [smem:[#allocation5]]
    %v524 = vld [vmem:[%s13] sm:$0xff]
    %v525 = vld [vmem:[%s13 + $0x8] sm:$0xff]
    %v526 = vld [vmem:[%s13 + $0x10] sm:$0xff]
    %v527 = vld [vmem:[%s13 + $0x18] sm:$0xff]
    %v528 = vld [vmem:[%s14] sm:$0x1]
    %v529 = vld [vmem:[%s15] sm:$0x1]
    %v530 = vld [vmem:[%s16] sm:$0xff]
    %v531 = vld [vmem:[%s16 + $0x8] sm:$0xff]
    %v532 = vld [vmem:[%s16 + $0x10] sm:$0xff]
    %v533 = vld [vmem:[%s16 + $0x18] sm:$0xff]
    %v534 = vld [vmem:[%s16 + $0x20] sm:$0xff]
    %v535 = vld [vmem:[%s16 + $0x28] sm:$0xff]
    %v536 = vld [vmem:[%s16 + $0x30] sm:$0xff]
    %v537 = vld [vmem:[%s16 + $0x38] sm:$0xff]
    %538 = vmatpush.msra.mxu0 0.0
    %539 = vmatpush.msra.mxu0 0.0
    %540 = vmatpush.msra.mxu0 0.0
    %541 = vmatpush.msra.mxu0 0.0
    %542 = vmatpush.msra.mxu0 0.0
    %543 = vmatpush.msra.mxu0 0.0
    %544 = vmatpush.msra.mxu0 0.0
    %545 = vmatpush.msra.mxu0 0.0
    %546 = vmatpush.msra.mxu0 0.0
    %547 = vmatpush.msra.mxu0 0.0
    %548 = vmatpush.msra.mxu0 0.0
    %549 = vmatpush.msra.mxu0 0.0
    %550 = vmatpush.msra.mxu0 0.0
    %551 = vmatpush.msra.mxu0 0.0
    %552 = vmatpush.msra.mxu0 %v521
    %553 = vmatpush.msra.mxu0 %v520
    %554 = vmatmul.f32.gmra.mxu0 %v168
    %v555 = vpop.f32.mrf.mxu0
    %v556 = vadd.f32 0.0, %v555
    %557 = vmatmul.f32.gmra.mxu0 %v171
    %v558 = vpop.f32.mrf.mxu0
    %v559 = vadd.f32 0.0, %v558
    %560 = vmatmul.f32.gmra.mxu0 %v174
    %v561 = vpop.f32.mrf.mxu0
    %v562 = vadd.f32 0.0, %v561
    %563 = vmatmul.f32.gmra.mxu0 %v177
    %v564 = vpop.f32.mrf.mxu0
    %v565 = vadd.f32 0.0, %v564
    %566 = vdwg.mxu0
    %v567 = vmax.f32 %v556, 0.0
    %v568 = vmax.f32 %v559, 0.0
    %v569 = vmax.f32 %v562, 0.0
    %v570 = vmax.f32 %v565, 0.0
    %v571 = vadd.f32 %v567, 1e-07
    %v572 = vadd.f32 %v568, 1e-07
    %v573 = vadd.f32 %v569, 1e-07
    %v574 = vadd.f32 %v570, 1e-07
    %v575 = vstv %s522
    %v576 = vmul.f32 %v571, %v575
    %v577 = vmul.f32 %v572, %v575
    %v578 = vmul.f32 %v573, %v575
    %v579 = vmul.f32 %v574, %v575
    %v580 = vsel %vm221, %v576, -inf
    %v581 = vsel %vm221, %v577, -inf
    %v582 = vsel %vm221, %v578, -inf
    %v583 = vsel %vm221, %v579, -inf
    %v584 = vmax.f32 %v580, %v581
    %v585 = vmax.f32 %v582, %v583
    %v586 = vmax.f32 %v584, %v585
    %v587 = vrot.slane %v586, 4
    %v588 = vmax.f32 %v586, %v587
    %v589 = vrot.slane %v588, 2
    %v590 = vmax.f32 %v588, %v589
    %v591 = vrot.slane %v590, 1
    %v592 = vmax.f32 %v590, %v591
    %v593 = vsub.f32 %v576, %v592
    %v594 = vsub.f32 %v577, %v592
    %v595 = vsub.f32 %v578, %v592
    %v596 = vsub.f32 %v579, %v592
    %v597 = vmul.f32 %v593, 1.442695
    %v598 = vpow.pop %v597
    %v599 = vmul.f32 %v594, 1.442695
    %v600 = vpow.pop %v599
    %v601 = vmul.f32 %v595, 1.442695
    %v602 = vpow.pop %v601
    %v603 = vmul.f32 %v596, 1.442695
    %v604 = vpow.pop %v603
    %v605 = vmul.f32 %v598, %v571
    %v606 = vmul.f32 %v600, %v572
    %v607 = vmul.f32 %v602, %v573
    %v608 = vmul.f32 %v604, %v574
    %613 = vrot.lane.b32.xlu0 %v605, 32
    %v614 = vpop.permute.xlu0 %613
    %615 = vrot.lane.b32.xlu0 %v606, 32
    %v616 = vpop.permute.xlu0 %615
    %617 = vrot.lane.b32.xlu0 %v607, 32
    %v618 = vpop.permute.xlu0 %617
    %619 = vrot.lane.b32.xlu0 %v608, 32
    %v620 = vpop.permute.xlu0 %619
    %v625 = vsel %vm221, %v598, %v614
    %v626 = vsel %vm221, %v600, %v616
    %v627 = vsel %vm221, %v602, %v618
    %v628 = vsel %vm221, %v604, %v620
    %629 = vmatpush.msra.mxu0 0.0
    %630 = vmatpush.msra.mxu0 0.0
    %631 = vmatpush.msra.mxu0 0.0
    %632 = vmatpush.msra.mxu0 0.0
    %633 = vmatpush.msra.mxu0 0.0
    %634 = vmatpush.msra.mxu0 0.0
    %635 = vmatpush.msra.mxu0 0.0
    %636 = vmatpush.msra.mxu0 0.0
    %637 = vmatpush.msra.mxu0 0.0
    %638 = vmatpush.msra.mxu0 0.0
    %639 = vmatpush.msra.mxu0 0.0
    %640 = vmatpush.msra.mxu0 0.0
    %641 = vmatpush.msra.mxu0 %v628
    %642 = vmatpush.msra.mxu0 %v627
    %643 = vmatpush.msra.mxu0 %v626
    %644 = vmatpush.msra.mxu0 %v625
    %645 = vmatmul.f32.gmra.mxu0 %v272
    %v646 = vpop.f32.mrf.mxu0
    %v647 = vadd.f32 0.0, %v646
    %648 = vmatmul.f32.gmra.mxu0 %v275
    %v649 = vpop.f32.mrf.mxu0
    %v650 = vadd.f32 0.0, %v649
    %651 = vdwg.mxu0
    %v652 = vmax.f32 %v647, 1e-12
    %v653 = vmax.f32 %v650, 1e-12
    %v654 = vrcp.pop %v652
    %v655 = vrcp.pop %v653
    %658 = vrot.lane.b32.xlu0 %v654, 32
    %v659 = vpop.permute.xlu0 %658
    %660 = vrot.lane.b32.xlu0 %v655, 32
    %v661 = vpop.permute.xlu0 %660
    %v664 = vmul.f32 %v647, %v659
    %v665 = vmul.f32 %v650, %v661
    %v666 = vmul.f32 %v664, %v664
    %v667 = vmul.f32 %v665, %v665
    %670 = vrot.lane.b32.xlu0 %v666, 96
    %v671 = vpop.permute.xlu0 %670
    %672 = vrot.lane.b32.xlu0 %v667, 96
    %v673 = vpop.permute.xlu0 %672
    %v676 = vsel %vm221, %v671, 0.0
    %677 = vadd.xlane.f32.xlu0 %v676
    %v678 = vpop.xlane.xlu0 %677
    %v679 = vsel %vm221, %v673, 0.0
    %680 = vadd.xlane.f32.xlu0 %v679
    %v681 = vpop.xlane.xlu0 %680
    %v682 = vmul.f32 %v520, %v520
    %v683 = vmul.f32 %v521, %v521
    %v684 = vsel %vm221, %v682, 0.0
    %685 = vadd.xlane.f32.xlu0 %v684
    %v686 = vpop.xlane.xlu0 %685
    %v687 = vsel %vm221, %v683, 0.0
    %688 = vadd.xlane.f32.xlu0 %v687
    %v689 = vpop.xlane.xlu0 %688
    %v690 = vmax.f32 %v678, 1e-24
    %v691 = vmax.f32 %v681, 1e-24
    %v692 = vrsqrt.pop %v690
    %v693 = vmul.f32 %v692, %v690
    %v694 = vmul.f32 %v693, %v692
    %v695 = vmul.f32 0.5, %v694
    %v696 = vsub.f32 1.5, %v695
    %v697 = vmul.f32 %v692, %v696
    %vm698 = vweird.f32 %v690
    %vm699 = vweird.f32 %v692
    %vm700 = vmor %vm698, %vm699
    %v701 = vsel %vm700, %v692, %v697
    %v702 = vrsqrt.pop %v691
    %v703 = vmul.f32 %v702, %v691
    %v704 = vmul.f32 %v703, %v702
    %v705 = vmul.f32 0.5, %v704
    %v706 = vsub.f32 1.5, %v705
    %v707 = vmul.f32 %v702, %v706
    %vm708 = vweird.f32 %v691
    %vm709 = vweird.f32 %v702
    %vm710 = vmor %vm708, %vm709
    %v711 = vsel %vm710, %v702, %v707
    %v712 = vrsqrt.pop %v686
    %v713 = vmul.f32 %v712, %v686
    %v714 = vmul.f32 %v713, %v712
    %v715 = vmul.f32 0.5, %v714
    %v716 = vsub.f32 1.5, %v715
    %v717 = vmul.f32 %v712, %v716
    %v718 = vmul.f32 %v686, %v717
    %vm719 = vcmp.eq.f32.partialorder %v686, inf
    %v720 = vsel %vm719, %v686, %v718
    %vm721 = vcmp.eq.f32.partialorder %v686, 0.0
    %v722 = vand.u32 %v686, 2147483648
    %v723 = vsel %vm721, %v722, %v720
    %v724 = vrsqrt.pop %v689
    %v725 = vmul.f32 %v724, %v689
    %v726 = vmul.f32 %v725, %v724
    %v727 = vmul.f32 0.5, %v726
    %v728 = vsub.f32 1.5, %v727
    %v729 = vmul.f32 %v724, %v728
    %v730 = vmul.f32 %v689, %v729
    %vm731 = vcmp.eq.f32.partialorder %v689, inf
    %v732 = vsel %vm731, %v689, %v730
    %vm733 = vcmp.eq.f32.partialorder %v689, 0.0
    %v734 = vand.u32 %v689, 2147483648
    %v735 = vsel %vm733, %v734, %v732
    %v736 = vmul.f32 %v701, %v723
    %v737 = vmul.f32 %v711, %v735
    %v738 = vstv %s523
    %v739 = vmul.f32 %v736, %v738
    %v740 = vmul.f32 %v737, %v738
    %v741 = vmul.f32 %v664, %v739
    %v742 = vmul.f32 %v665, %v740
    %745 = vrot.lane.b32.xlu0 %v520, 32
    %v746 = vpop.permute.xlu0 %745
    %747 = vrot.lane.b32.xlu0 %v521, 32
    %v748 = vpop.permute.xlu0 %747
    %v751 = vadd.f32 %v741, %v746
    %v752 = vadd.f32 %v742, %v748
    %755 = vrot.lane.b32.xlu0 %v751, 96
    %v756 = vpop.permute.xlu0 %755
    %757 = vrot.lane.b32.xlu0 %v752, 96
    %v758 = vpop.permute.xlu0 %757
    %v759 = vsel %vm221, %v756, 0
    %v761 = vsel %vm221, %v758, 0
    %763 = vmatpush.msra.mxu0 0.0
    %764 = vmatpush.msra.mxu0 0.0
    %765 = vmatpush.msra.mxu0 0.0
    %766 = vmatpush.msra.mxu0 0.0
    %767 = vmatpush.msra.mxu0 0.0
    %768 = vmatpush.msra.mxu0 0.0
    %769 = vmatpush.msra.mxu0 0.0
    %770 = vmatpush.msra.mxu0 0.0
    %771 = vmatpush.msra.mxu0 0.0
    %772 = vmatpush.msra.mxu0 0.0
    %773 = vmatpush.msra.mxu0 0.0
    %774 = vmatpush.msra.mxu0 0.0
    %775 = vmatpush.msra.mxu0 %v527
    %776 = vmatpush.msra.mxu0 %v526
    %777 = vmatpush.msra.mxu0 %v525
    %778 = vmatpush.msra.mxu0 %v524
    %779 = vmatmul.f32.gmra.mxu0 %v759
    %v780 = vpop.f32.mrf.mxu0
    %v781 = vadd.f32 0.0, %v780
    %782 = vmatmul.f32.gmra.mxu0 %v761
    %v783 = vpop.f32.mrf.mxu0
    %v784 = vadd.f32 0.0, %v783
    %785 = vdwg.mxu0
    %v786 = vsel %vm434, %v781, 0.0
    %v787 = vsel %vm434, %v784, 0.0
    %v788 = vadd.f32 %v786, %v787
    %v789 = vrot.slane %v788, 4
    %v790 = vadd.f32 %v788, %v789
    %v791 = vrot.slane %v790, 2
    %v792 = vadd.f32 %v790, %v791
    %v793 = vrot.slane %v792, 1
    %v794 = vadd.f32 %v792, %v793
    %v795 = vmul.f32 %v794, %v450
    %v796 = vsub.f32 %v781, %v795
    %v797 = vsub.f32 %v784, %v795
    %v798 = vmul.f32 %v796, %v796
    %v799 = vmul.f32 %v797, %v797
    %v800 = vsel %vm434, %v798, 0.0
    %v801 = vsel %vm434, %v799, 0.0
    %v802 = vadd.f32 %v800, %v801
    %v803 = vrot.slane %v802, 4
    %v804 = vadd.f32 %v802, %v803
    %v805 = vrot.slane %v804, 2
    %v806 = vadd.f32 %v804, %v805
    %v807 = vrot.slane %v806, 1
    %v808 = vadd.f32 %v806, %v807
    %v809 = vmul.f32 %v808, %v450
    %v810 = vadd.f32 %v809, 1e-05
    %v811 = vrsqrt.pop %v810
    %v812 = vmul.f32 %v811, %v810
    %v813 = vmul.f32 %v812, %v811
    %v814 = vmul.f32 0.5, %v813
    %v815 = vsub.f32 1.5, %v814
    %v816 = vmul.f32 %v811, %v815
    %vm817 = vweird.f32 %v810
    %vm818 = vweird.f32 %v811
    %vm819 = vmor %vm817, %vm818
    %v820 = vsel %vm819, %v811, %v816
    %v821 = vmul.f32 %v796, %v820
    %v822 = vmul.f32 %v797, %v820
    %v824 = vperm.slane %v528, 0
    %v826 = vmul.f32 %v821, %v824
    %v827 = vmul.f32 %v822, %v824
    %v829 = vperm.slane %v529, 0
    %v831 = vadd.f32 %v826, %v829
    %v832 = vadd.f32 %v827, %v829
    %v833 = vmax.f32 %v831, 0.0
    %v834 = vmax.f32 %v832, 0.0
    %v836 = vsel %vm434, %v833, 0
    %v839 = vsel %vm434, %v834, 0
    %841 = vmatpush.msra.mxu0 0.0
    %842 = vmatpush.msra.mxu0 0.0
    %843 = vmatpush.msra.mxu0 0.0
    %844 = vmatpush.msra.mxu0 0.0
    %845 = vmatpush.msra.mxu0 0.0
    %846 = vmatpush.msra.mxu0 0.0
    %847 = vmatpush.msra.mxu0 0.0
    %848 = vmatpush.msra.mxu0 0.0
    %849 = vmatpush.msra.mxu0 %v537
    %850 = vmatpush.msra.mxu0 %v536
    %851 = vmatpush.msra.mxu0 %v535
    %852 = vmatpush.msra.mxu0 %v534
    %853 = vmatpush.msra.mxu0 %v533
    %854 = vmatpush.msra.mxu0 %v532
    %855 = vmatpush.msra.mxu0 %v531
    %856 = vmatpush.msra.mxu0 %v530
    %857 = vmatmul.f32.gmra.mxu0 %v836
    %v858 = vpop.f32.mrf.mxu0
    %v859 = vadd.f32 0.0, %v858
    %860 = vmatmul.f32.gmra.mxu0 %v839
    %v861 = vpop.f32.mrf.mxu0
    %v862 = vadd.f32 0.0, %v861
    %863 = vdwg.mxu0
    %v864 = vtanh.pop %v859
    %v865 = vtanh.pop %v862
    %s866 = sld [smem:[#allocation6]]
    %s867 = sld [smem:[#allocation7]]
    %v868 = vld [vmem:[%s19] sm:$0xff]
    %v869 = vld [vmem:[%s19 + $0x8] sm:$0xff]
    %v870 = vld [vmem:[%s19 + $0x10] sm:$0xff]
    %v871 = vld [vmem:[%s19 + $0x18] sm:$0xff]
    %v872 = vld [vmem:[%s20] sm:$0x1]
    %v873 = vld [vmem:[%s21] sm:$0x1]
    %v874 = vld [vmem:[%s22] sm:$0xff]
    %v875 = vld [vmem:[%s22 + $0x8] sm:$0xff]
    %v876 = vld [vmem:[%s22 + $0x10] sm:$0xff]
    %v877 = vld [vmem:[%s22 + $0x18] sm:$0xff]
    %v878 = vld [vmem:[%s22 + $0x20] sm:$0xff]
    %v879 = vld [vmem:[%s22 + $0x28] sm:$0xff]
    %v880 = vld [vmem:[%s22 + $0x30] sm:$0xff]
    %v881 = vld [vmem:[%s22 + $0x38] sm:$0xff]
    %882 = vmatpush.msra.mxu0 0.0
    %883 = vmatpush.msra.mxu0 0.0
    %884 = vmatpush.msra.mxu0 0.0
    %885 = vmatpush.msra.mxu0 0.0
    %886 = vmatpush.msra.mxu0 0.0
    %887 = vmatpush.msra.mxu0 0.0
    %888 = vmatpush.msra.mxu0 0.0
    %889 = vmatpush.msra.mxu0 0.0
    %890 = vmatpush.msra.mxu0 0.0
    %891 = vmatpush.msra.mxu0 0.0
    %892 = vmatpush.msra.mxu0 0.0
    %893 = vmatpush.msra.mxu0 0.0
    %894 = vmatpush.msra.mxu0 0.0
    %895 = vmatpush.msra.mxu0 0.0
    %896 = vmatpush.msra.mxu0 %v865
    %897 = vmatpush.msra.mxu0 %v864
    %898 = vmatmul.f32.gmra.mxu0 %v168
    %v899 = vpop.f32.mrf.mxu0
    %v900 = vadd.f32 0.0, %v899
    %901 = vmatmul.f32.gmra.mxu0 %v171
    %v902 = vpop.f32.mrf.mxu0
    %v903 = vadd.f32 0.0, %v902
    %904 = vmatmul.f32.gmra.mxu0 %v174
    %v905 = vpop.f32.mrf.mxu0
    %v906 = vadd.f32 0.0, %v905
    %907 = vmatmul.f32.gmra.mxu0 %v177
    %v908 = vpop.f32.mrf.mxu0
    %v909 = vadd.f32 0.0, %v908
    %910 = vdwg.mxu0
    %v911 = vmax.f32 %v900, 0.0
    %v912 = vmax.f32 %v903, 0.0
    %v913 = vmax.f32 %v906, 0.0
    %v914 = vmax.f32 %v909, 0.0
    %v915 = vadd.f32 %v911, 1e-07
    %v916 = vadd.f32 %v912, 1e-07
    %v917 = vadd.f32 %v913, 1e-07
    %v918 = vadd.f32 %v914, 1e-07
    %v919 = vstv %s866
    %v920 = vmul.f32 %v915, %v919
    %v921 = vmul.f32 %v916, %v919
    %v922 = vmul.f32 %v917, %v919
    %v923 = vmul.f32 %v918, %v919
    %v924 = vsel %vm221, %v920, -inf
    %v925 = vsel %vm221, %v921, -inf
    %v926 = vsel %vm221, %v922, -inf
    %v927 = vsel %vm221, %v923, -inf
    %v928 = vmax.f32 %v924, %v925
    %v929 = vmax.f32 %v926, %v927
    %v930 = vmax.f32 %v928, %v929
    %v931 = vrot.slane %v930, 4
    %v932 = vmax.f32 %v930, %v931
    %v933 = vrot.slane %v932, 2
    %v934 = vmax.f32 %v932, %v933
    %v935 = vrot.slane %v934, 1
    %v936 = vmax.f32 %v934, %v935
    %v937 = vsub.f32 %v920, %v936
    %v938 = vsub.f32 %v921, %v936
    %v939 = vsub.f32 %v922, %v936
    %v940 = vsub.f32 %v923, %v936
    %v941 = vmul.f32 %v937, 1.442695
    %v942 = vpow.pop %v941
    %v943 = vmul.f32 %v938, 1.442695
    %v944 = vpow.pop %v943
    %v945 = vmul.f32 %v939, 1.442695
    %v946 = vpow.pop %v945
    %v947 = vmul.f32 %v940, 1.442695
    %v948 = vpow.pop %v947
    %v949 = vmul.f32 %v942, %v915
    %v950 = vmul.f32 %v944, %v916
    %v951 = vmul.f32 %v946, %v917
    %v952 = vmul.f32 %v948, %v918
    %957 = vrot.lane.b32.xlu0 %v949, 32
    %v958 = vpop.permute.xlu0 %957
    %959 = vrot.lane.b32.xlu0 %v950, 32
    %v960 = vpop.permute.xlu0 %959
    %961 = vrot.lane.b32.xlu0 %v951, 32
    %v962 = vpop.permute.xlu0 %961
    %963 = vrot.lane.b32.xlu0 %v952, 32
    %v964 = vpop.permute.xlu0 %963
    %v969 = vsel %vm221, %v942, %v958
    %v970 = vsel %vm221, %v944, %v960
    %v971 = vsel %vm221, %v946, %v962
    %v972 = vsel %vm221, %v948, %v964
    %973 = vmatpush.msra.mxu0 0.0
    %974 = vmatpush.msra.mxu0 0.0
    %975 = vmatpush.msra.mxu0 0.0
    %976 = vmatpush.msra.mxu0 0.0
    %977 = vmatpush.msra.mxu0 0.0
    %978 = vmatpush.msra.mxu0 0.0
    %979 = vmatpush.msra.mxu0 0.0
    %980 = vmatpush.msra.mxu0 0.0
    %981 = vmatpush.msra.mxu0 0.0
    %982 = vmatpush.msra.mxu0 0.0
    %983 = vmatpush.msra.mxu0 0.0
    %984 = vmatpush.msra.mxu0 0.0
    %985 = vmatpush.msra.mxu0 %v972
    %986 = vmatpush.msra.mxu0 %v971
    %987 = vmatpush.msra.mxu0 %v970
    %988 = vmatpush.msra.mxu0 %v969
    %989 = vmatmul.f32.gmra.mxu0 %v272
    %v990 = vpop.f32.mrf.mxu0
    %v991 = vadd.f32 0.0, %v990
    %992 = vmatmul.f32.gmra.mxu0 %v275
    %v993 = vpop.f32.mrf.mxu0
    %v994 = vadd.f32 0.0, %v993
    %995 = vdwg.mxu0
    %v996 = vmax.f32 %v991, 1e-12
    %v997 = vmax.f32 %v994, 1e-12
    %v998 = vrcp.pop %v996
    %v999 = vrcp.pop %v997
    %1002 = vrot.lane.b32.xlu0 %v998, 32
    %v1003 = vpop.permute.xlu0 %1002
    %1004 = vrot.lane.b32.xlu0 %v999, 32
    %v1005 = vpop.permute.xlu0 %1004
    %v1008 = vmul.f32 %v991, %v1003
    %v1009 = vmul.f32 %v994, %v1005
    %v1010 = vmul.f32 %v1008, %v1008
    %v1011 = vmul.f32 %v1009, %v1009
    %1014 = vrot.lane.b32.xlu0 %v1010, 96
    %v1015 = vpop.permute.xlu0 %1014
    %1016 = vrot.lane.b32.xlu0 %v1011, 96
    %v1017 = vpop.permute.xlu0 %1016
    %v1020 = vsel %vm221, %v1015, 0.0
    %1021 = vadd.xlane.f32.xlu0 %v1020
    %v1022 = vpop.xlane.xlu0 %1021
    %v1023 = vsel %vm221, %v1017, 0.0
    %1024 = vadd.xlane.f32.xlu0 %v1023
    %v1025 = vpop.xlane.xlu0 %1024
    %v1026 = vmul.f32 %v864, %v864
    %v1027 = vmul.f32 %v865, %v865
    %v1028 = vsel %vm221, %v1026, 0.0
    %1029 = vadd.xlane.f32.xlu0 %v1028
    %v1030 = vpop.xlane.xlu0 %1029
    %v1031 = vsel %vm221, %v1027, 0.0
    %1032 = vadd.xlane.f32.xlu0 %v1031
    %v1033 = vpop.xlane.xlu0 %1032
    %v1034 = vmax.f32 %v1022, 1e-24
    %v1035 = vmax.f32 %v1025, 1e-24
    %v1036 = vrsqrt.pop %v1034
    %v1037 = vmul.f32 %v1036, %v1034
    %v1038 = vmul.f32 %v1037, %v1036
    %v1039 = vmul.f32 0.5, %v1038
    %v1040 = vsub.f32 1.5, %v1039
    %v1041 = vmul.f32 %v1036, %v1040
    %vm1042 = vweird.f32 %v1034
    %vm1043 = vweird.f32 %v1036
    %vm1044 = vmor %vm1042, %vm1043
    %v1045 = vsel %vm1044, %v1036, %v1041
    %v1046 = vrsqrt.pop %v1035
    %v1047 = vmul.f32 %v1046, %v1035
    %v1048 = vmul.f32 %v1047, %v1046
    %v1049 = vmul.f32 0.5, %v1048
    %v1050 = vsub.f32 1.5, %v1049
    %v1051 = vmul.f32 %v1046, %v1050
    %vm1052 = vweird.f32 %v1035
    %vm1053 = vweird.f32 %v1046
    %vm1054 = vmor %vm1052, %vm1053
    %v1055 = vsel %vm1054, %v1046, %v1051
    %v1056 = vrsqrt.pop %v1030
    %v1057 = vmul.f32 %v1056, %v1030
    %v1058 = vmul.f32 %v1057, %v1056
    %v1059 = vmul.f32 0.5, %v1058
    %v1060 = vsub.f32 1.5, %v1059
    %v1061 = vmul.f32 %v1056, %v1060
    %v1062 = vmul.f32 %v1030, %v1061
    %vm1063 = vcmp.eq.f32.partialorder %v1030, inf
    %v1064 = vsel %vm1063, %v1030, %v1062
    %vm1065 = vcmp.eq.f32.partialorder %v1030, 0.0
    %v1066 = vand.u32 %v1030, 2147483648
    %v1067 = vsel %vm1065, %v1066, %v1064
    %v1068 = vrsqrt.pop %v1033
    %v1069 = vmul.f32 %v1068, %v1033
    %v1070 = vmul.f32 %v1069, %v1068
    %v1071 = vmul.f32 0.5, %v1070
    %v1072 = vsub.f32 1.5, %v1071
    %v1073 = vmul.f32 %v1068, %v1072
    %v1074 = vmul.f32 %v1033, %v1073
    %vm1075 = vcmp.eq.f32.partialorder %v1033, inf
    %v1076 = vsel %vm1075, %v1033, %v1074
    %vm1077 = vcmp.eq.f32.partialorder %v1033, 0.0
    %v1078 = vand.u32 %v1033, 2147483648
    %v1079 = vsel %vm1077, %v1078, %v1076
    %v1080 = vmul.f32 %v1045, %v1067
    %v1081 = vmul.f32 %v1055, %v1079
    %v1082 = vstv %s867
    %v1083 = vmul.f32 %v1080, %v1082
    %v1084 = vmul.f32 %v1081, %v1082
    %v1085 = vmul.f32 %v1008, %v1083
    %v1086 = vmul.f32 %v1009, %v1084
    %1089 = vrot.lane.b32.xlu0 %v864, 32
    %v1090 = vpop.permute.xlu0 %1089
    %1091 = vrot.lane.b32.xlu0 %v865, 32
    %v1092 = vpop.permute.xlu0 %1091
    %v1095 = vadd.f32 %v1085, %v1090
    %v1096 = vadd.f32 %v1086, %v1092
    %1099 = vrot.lane.b32.xlu0 %v1095, 96
    %v1100 = vpop.permute.xlu0 %1099
    %1101 = vrot.lane.b32.xlu0 %v1096, 96
    %v1102 = vpop.permute.xlu0 %1101
    %v1103 = vsel %vm221, %v1100, 0
    %v1105 = vsel %vm221, %v1102, 0
    %1107 = vmatpush.msra.mxu0 0.0
    %1108 = vmatpush.msra.mxu0 0.0
    %1109 = vmatpush.msra.mxu0 0.0
    %1110 = vmatpush.msra.mxu0 0.0
    %1111 = vmatpush.msra.mxu0 0.0
    %1112 = vmatpush.msra.mxu0 0.0
    %1113 = vmatpush.msra.mxu0 0.0
    %1114 = vmatpush.msra.mxu0 0.0
    %1115 = vmatpush.msra.mxu0 0.0
    %1116 = vmatpush.msra.mxu0 0.0
    %1117 = vmatpush.msra.mxu0 0.0
    %1118 = vmatpush.msra.mxu0 0.0
    %1119 = vmatpush.msra.mxu0 %v871
    %1120 = vmatpush.msra.mxu0 %v870
    %1121 = vmatpush.msra.mxu0 %v869
    %1122 = vmatpush.msra.mxu0 %v868
    %1123 = vmatmul.f32.gmra.mxu0 %v1103
    %v1124 = vpop.f32.mrf.mxu0
    %v1125 = vadd.f32 0.0, %v1124
    %1126 = vmatmul.f32.gmra.mxu0 %v1105
    %v1127 = vpop.f32.mrf.mxu0
    %v1128 = vadd.f32 0.0, %v1127
    %1129 = vdwg.mxu0
    %v1130 = vsel %vm434, %v1125, 0.0
    %v1131 = vsel %vm434, %v1128, 0.0
    %v1132 = vadd.f32 %v1130, %v1131
    %v1133 = vrot.slane %v1132, 4
    %v1134 = vadd.f32 %v1132, %v1133
    %v1135 = vrot.slane %v1134, 2
    %v1136 = vadd.f32 %v1134, %v1135
    %v1137 = vrot.slane %v1136, 1
    %v1138 = vadd.f32 %v1136, %v1137
    %v1139 = vmul.f32 %v1138, %v450
    %v1140 = vsub.f32 %v1125, %v1139
    %v1141 = vsub.f32 %v1128, %v1139
    %v1142 = vmul.f32 %v1140, %v1140
    %v1143 = vmul.f32 %v1141, %v1141
    %v1144 = vsel %vm434, %v1142, 0.0
    %v1145 = vsel %vm434, %v1143, 0.0
    %v1146 = vadd.f32 %v1144, %v1145
    %v1147 = vrot.slane %v1146, 4
    %v1148 = vadd.f32 %v1146, %v1147
    %v1149 = vrot.slane %v1148, 2
    %v1150 = vadd.f32 %v1148, %v1149
    %v1151 = vrot.slane %v1150, 1
    %v1152 = vadd.f32 %v1150, %v1151
    %v1153 = vmul.f32 %v1152, %v450
    %v1154 = vadd.f32 %v1153, 1e-05
    %v1155 = vrsqrt.pop %v1154
    %v1156 = vmul.f32 %v1155, %v1154
    %v1157 = vmul.f32 %v1156, %v1155
    %v1158 = vmul.f32 0.5, %v1157
    %v1159 = vsub.f32 1.5, %v1158
    %v1160 = vmul.f32 %v1155, %v1159
    %vm1161 = vweird.f32 %v1154
    %vm1162 = vweird.f32 %v1155
    %vm1163 = vmor %vm1161, %vm1162
    %v1164 = vsel %vm1163, %v1155, %v1160
    %v1165 = vmul.f32 %v1140, %v1164
    %v1166 = vmul.f32 %v1141, %v1164
    %v1168 = vperm.slane %v872, 0
    %v1170 = vmul.f32 %v1165, %v1168
    %v1171 = vmul.f32 %v1166, %v1168
    %v1173 = vperm.slane %v873, 0
    %v1175 = vadd.f32 %v1170, %v1173
    %v1176 = vadd.f32 %v1171, %v1173
    %v1177 = vmax.f32 %v1175, 0.0
    %v1178 = vmax.f32 %v1176, 0.0
    %v1180 = vsel %vm434, %v1177, 0
    %v1183 = vsel %vm434, %v1178, 0
    %1185 = vmatpush.msra.mxu0 0.0
    %1186 = vmatpush.msra.mxu0 0.0
    %1187 = vmatpush.msra.mxu0 0.0
    %1188 = vmatpush.msra.mxu0 0.0
    %1189 = vmatpush.msra.mxu0 0.0
    %1190 = vmatpush.msra.mxu0 0.0
    %1191 = vmatpush.msra.mxu0 0.0
    %1192 = vmatpush.msra.mxu0 0.0
    %1193 = vmatpush.msra.mxu0 %v881
    %1194 = vmatpush.msra.mxu0 %v880
    %1195 = vmatpush.msra.mxu0 %v879
    %1196 = vmatpush.msra.mxu0 %v878
    %1197 = vmatpush.msra.mxu0 %v877
    %1198 = vmatpush.msra.mxu0 %v876
    %1199 = vmatpush.msra.mxu0 %v875
    %1200 = vmatpush.msra.mxu0 %v874
    %1201 = vmatmul.f32.gmra.mxu0 %v1180
    %v1202 = vpop.f32.mrf.mxu0
    %v1203 = vadd.f32 0.0, %v1202
    %1204 = vmatmul.f32.gmra.mxu0 %v1183
    %v1205 = vpop.f32.mrf.mxu0
    %v1206 = vadd.f32 0.0, %v1205
    %1207 = vdwg.mxu0
    %1208 = vst.msk [vmem:[#allocation8] sm:$0xff] %vm221, %v1203
    %1209 = vst.msk [vmem:[#allocation8 + $0x8] sm:$0xff] %vm221, %v1206
    // Predicated region
    $region94: #{tpu_custom_call.1} parent=1 // pred_check
      _
    $region95: #{tpu_custom_call.1} parent=1 // pred_check_branch
      %1211 = sbr.rel (0) target = $region97
    $region96: #{tpu_custom_call.1} parent=1 // pred_region
      %1213 = vsyncadd [#allocation9], 0
      %s1214 = sshll.u32 [#allocation8], 4
      %s1215 = int_to_ptr.vmem [resolvable:$true] %s1214
      %s1216 = sshll.u32 %s23, 4
      %s1217 = int_to_ptr.hbm [resolvable:$true] %s1216
      %1222 = dma.vmem_to_hbm [thread:$0]  %s1215, 256, %s1217, [#allocation9], 128, 128, 8
    $region97: #{tpu_custom_call.1} parent=1 // pred_fallthru
      _
    // Predicated region
    $region98: #{tpu_custom_call.1} parent=1 // pred_check
      _
    $region99: #{tpu_custom_call.1} parent=1 // pred_check_branch
      %1224 = sbr.rel (0) target = $region101
    $region100: #{tpu_custom_call.1} parent=1 // pred_region
      %1226 = dma.done [#allocation9], 256
    $region101: #{tpu_custom_call.1} parent=1 // pred_fallthru
      _
    %1227 = vsyncpa [#allocation9], 1

</llo_original>
